<compile_context>
chip_gen: v7x
topology: tpu7x:2x2x1
jax: 0.10.0
libtpu: 0.0.40
codegen_flags: <defaults>
</compile_context>

<pallas_src>
import functools

import jax
import jax.numpy as jnp
from jax.experimental import pallas as pl
from jax.experimental.pallas import tpu as pltpu

BN_EPS = 1e-5
LANE = 128


def _round_up(v, m):
    return (v + m - 1) // m * m


def _pad_to(a, shape):
    pads = [(0, t - s) for s, t in zip(a.shape, shape)]
    return jnp.pad(a, pads)


def _sage_kernel(x_ref, adj_ref, w1_ref, b1_ref, wcs_ref, bcs_ref,
                 gamma_ref, beta_ref, w2_ref, b2_ref,
                 h_ref, out_ref, cat_ref, *, n_valid):
    """Whole forward pass; all (padded) operands resident in VMEM.

    Matmul inputs are bf16 (native MXU dtype) with f32 accumulation; BN math in f32.
    """
    n_pad = x_ref.shape[0]
    hp = w1_ref.shape[1]                         # padded hidden dim (multiple of 128)
    adj = adj_ref[...]                           # (N_p, N_p) bf16

    # Row mask for BN statistics over the real (unpadded) node rows. Hoisted out of
    # the layer loop (broadcast_in_dim is not CSE'd by JAX).
    if n_valid != n_pad:
        row_ids = jax.lax.broadcasted_iota(jnp.int32, (n_pad, hp), 0)
        row_mask = (row_ids < n_valid).astype(jnp.float32)
    else:
        row_mask = None

    # --- lin1 + relu -------------------------------------------------------
    x = jnp.dot(x_ref[...], w1_ref[...],
                preferred_element_type=jnp.float32) + b1_ref[...]
    x = jnp.maximum(x, 0.0)                      # (N_p, H_p) f32

    num_layers = wcs_ref.shape[0]
    # Static unroll is fine for shallow nets; switch to lax.fori_loop (dynamic
    # wcs_ref[l] indexing already supported) if num_layers grows beyond ~3.
    for l in range(num_layers):
        xb = x.astype(jnp.bfloat16)
        # mean aggregation: A @ x
        agg = jnp.dot(adj, xb, preferred_element_type=jnp.float32)
        # fused conv + skip: [agg | x] @ [Wc ; Ws]  -> single MXU call, K = 2*H_p
        cat_ref[:, :hp] = agg.astype(jnp.bfloat16)
        cat_ref[:, hp:] = xb
        y = jnp.dot(cat_ref[...], wcs_ref[l],
                    preferred_element_type=jnp.float32) + bcs_ref[l:l + 1, :]

        if l == num_layers - 1:                  # h = x.clone() before BN/relu/dropout
            h_ref[...] = y

        # --- BatchNorm1d (training-mode batch statistics), folded affine ----
        if row_mask is not None:
            mean = jnp.sum(y * row_mask, axis=0, keepdims=True) / n_valid
            var = jnp.sum(((y - mean) * row_mask) ** 2, axis=0, keepdims=True) / n_valid
        else:
            mean = jnp.mean(y, axis=0, keepdims=True)
            var = jnp.mean((y - mean) ** 2, axis=0, keepdims=True)
        scale = gamma_ref[l:l + 1, :] * jax.lax.rsqrt(var + BN_EPS)
        offset = beta_ref[l:l + 1, :] - mean * scale
        x = jnp.maximum(y * scale + offset, 0.0)
        # dropout: identity (eval mode) -- see TODO(synk) above.

    # --- lin2 ---------------------------------------------------------------
    out_ref[...] = jnp.dot(x.astype(jnp.bfloat16), w2_ref[...],
                           preferred_element_type=jnp.float32) + b2_ref[...]


def sage_forward(x, adj, params):
    n, cin = x.shape
    hid = params["w1"].shape[1]
    out_c = params["w2"].shape[1]
    num_layers = params["wc"].shape[0]

    # Pad every dim that ends up on the lane axis to a multiple of 128.
    n_p = _round_up(n, LANE)
    cin_p = _round_up(cin, LANE)
    hid_p = _round_up(hid, LANE)
    out_p = _round_up(out_c, LANE)

    bf, f32 = jnp.bfloat16, jnp.float32

    x_p = _pad_to(x, (n_p, cin_p)).astype(bf)
    adj_p = _pad_to(adj, (n_p, n_p)).astype(bf)

    w1 = _pad_to(params["w1"], (cin_p, hid_p)).astype(bf)
    b1 = _pad_to(params["b1"].reshape(1, -1), (1, hid_p)).astype(f32)

    # Pre-stack fused conv+skip weight: [Wc_l ; Ws_l] -> (L, 2*H_p, H_p), fused bias bc+bs.
    wc = _pad_to(params["wc"], (num_layers, hid_p, hid_p))
    ws = _pad_to(params["ws"], (num_layers, hid_p, hid_p))
    wcs = jnp.concatenate([wc, ws], axis=1).astype(bf)
    bcs = _pad_to(params["bc"] + params["bs"], (num_layers, hid_p)).astype(f32)

    gamma = _pad_to(params["gamma"], (num_layers, hid_p)).astype(f32)
    beta = _pad_to(params["beta"], (num_layers, hid_p)).astype(f32)
    w2 = _pad_to(params["w2"], (hid_p, out_p)).astype(bf)
    b2 = _pad_to(params["b2"].reshape(1, -1), (1, out_p)).astype(f32)

    # Advisory cost estimate so XLA can schedule around this call.
    flops = 2 * (n_p * cin_p * hid_p
                 + num_layers * (n_p * n_p * hid_p + n_p * (2 * hid_p) * hid_p)
                 + n_p * hid_p * out_p)
    bytes_accessed = (2 * (x_p.size + adj_p.size + w1.size + wcs.size + w2.size)
                      + 4 * (b1.size + bcs.size + gamma.size + beta.size + b2.size)
                      + 4 * (n_p * hid_p + n_p * out_p))
    cost = pl.CostEstimate(flops=flops,
                           transcendentals=num_layers * hid_p,
                           bytes_accessed=bytes_accessed)

    vmem = pl.BlockSpec(memory_space=pltpu.MemorySpace.VMEM)
    inputs = (x_p, adj_p, w1, b1, wcs, bcs, gamma, beta, w2, b2)

    h_pad, out_pad = pl.pallas_call(
        functools.partial(_sage_kernel, n_valid=n),
        out_shape=(jax.ShapeDtypeStruct((n_p, hid_p), f32),
                   jax.ShapeDtypeStruct((n_p, out_p), f32)),
        in_specs=[vmem] * len(inputs),
        out_specs=(vmem, vmem),
        scratch_shapes=[pltpu.VMEM((n_p, 2 * hid_p), bf)],
        compiler_params=pltpu.CompilerParams(vmem_limit_bytes=64 * 1024 * 1024),
        cost_estimate=cost,
    )(*inputs)

    return h_pad[:n, :hid], out_pad[:n, :out_c]


def build_mean_adj(edge_index, num_nodes):
    """Dense row-normalized aggregation matrix from (2, E) edge_index (src, dst)."""
    src, dst = edge_index[0], edge_index[1]
    a = jnp.zeros((num_nodes, num_nodes), jnp.float32)
    a = a.at[dst, src].add(1.0)
    deg = jnp.clip(jnp.sum(a, axis=1, keepdims=True), 1.0, None)
    return a / deg


def reference_forward(x, adj, params):
    """Pure-f32 JAX reference mirroring the PyTorch forward."""
    x = jnp.maximum(x @ params["w1"] + params["b1"], 0.0)
    num_layers = params["wc"].shape[0]
    h = None
    for l in range(num_layers):
        conv = (adj @ x) @ params["wc"][l] + params["bc"][l]
        skip = x @ params["ws"][l] + params["bs"][l]
        x = conv + skip
        if l == num_layers - 1:
            h = x
        mean = jnp.mean(x, axis=0, keepdims=True)
        var = jnp.mean((x - mean) ** 2, axis=0, keepdims=True)
        x = params["gamma"][l] * (x - mean) / jnp.sqrt(var + BN_EPS) + params["beta"][l]
        x = jnp.maximum(x, 0.0)
    return h, x @ params["w2"] + params["b2"]


def reference_forward_mixed(x, adj, params):
    """Reference mirroring the kernel's bf16-matmul / f32-accumulate numerics."""
    bf, f32 = jnp.bfloat16, jnp.float32
    adj_b = adj.astype(bf)
    x = jnp.dot(x.astype(bf), params["w1"].astype(bf),
                preferred_element_type=f32) + params["b1"]
    x = jnp.maximum(x, 0.0)
    num_layers = params["wc"].shape[0]
    h = None
    for l in range(num_layers):
        xb = x.astype(bf)
        agg = jnp.dot(adj_b, xb, preferred_element_type=f32).astype(bf)
        conv = jnp.dot(agg, params["wc"][l].astype(bf), preferred_element_type=f32)
        skip = jnp.dot(xb, params["ws"][l].astype(bf), preferred_element_type=f32)
        y = conv + skip + (params["bc"][l] + params["bs"][l])
        if l == num_layers - 1:
            h = y
        mean = jnp.mean(y, axis=0, keepdims=True)
        var = jnp.mean((y - mean) ** 2, axis=0, keepdims=True)
        scale = params["gamma"][l] * jax.lax.rsqrt(var + BN_EPS)
        x = jnp.maximum(y * scale + (params["beta"][l] - mean * scale), 0.0)
    out = jnp.dot(x.astype(bf), params["w2"].astype(bf),
                  preferred_element_type=f32) + params["b2"]
    return h, out


def init_params(key, in_channels, hidden, out_channels, num_layers):
    ks = jax.random.split(key, 8)
    s = 0.1
    return {
        "w1": s * jax.random.normal(ks[0], (in_channels, hidden), jnp.float32),
        "b1": s * jax.random.normal(ks[1], (1, hidden), jnp.float32),
        "wc": s * jax.random.normal(ks[2], (num_layers, hidden, hidden), jnp.float32),
        "bc": s * jax.random.normal(ks[3], (num_layers, hidden), jnp.float32),
        "ws": s * jax.random.normal(ks[4], (num_layers, hidden, hidden), jnp.float32),
        "bs": s * jax.random.normal(ks[5], (num_layers, hidden), jnp.float32),
        "gamma": jnp.ones((num_layers, hidden), jnp.float32),
        "beta": jnp.zeros((num_layers, hidden), jnp.float32),
        "w2": s * jax.random.normal(ks[6], (hidden, out_channels), jnp.float32),
        "b2": s * jax.random.normal(ks[7], (1, out_channels), jnp.float32),
    }


if __name__ == "__main__":
    N, IN_C, HID, OUT_C = 64, 16, 32, 8
    NUM_LAYERS = 2          # linear_l=True -> exactly num_layers SAGEConv blocks
    NUM_EDGES = 256

    root = jax.random.PRNGKey(0)
    k_x, k_src, k_dst, k_p = jax.random.split(root, 4)

    x = jax.random.normal(k_x, (N, IN_C), jnp.float32)
    edge_index = jnp.stack([
        jax.random.randint(k_src, (NUM_EDGES,), 0, N),
        jax.random.randint(k_dst, (NUM_EDGES,), 0, N),
    ])                                                   # (2, E)
    adj = build_mean_adj(edge_index, N)                  # (N, N) mean-aggregation matrix
    params = init_params(k_p, IN_C, HID, OUT_C, NUM_LAYERS)

    h, out = sage_forward(x, adj, params)
    jax.block_until_ready((h, out))

    # Tight check vs a reference with matching bf16-matmul / f32-accumulate numerics.
    h_mx, out_mx = reference_forward_mixed(x, adj, params)
    assert jnp.allclose(h, h_mx, atol=2e-3, rtol=2e-3), "h mismatch vs mixed-precision ref"
    assert jnp.allclose(out, out_mx, atol=2e-3, rtol=2e-3), "out mismatch vs mixed-precision ref"

    # Loose sanity check vs the full-f32 PyTorch-faithful reference (bf16 matmul inputs
    # introduce ~1e-2 relative differences by construction).
    h_f32, out_f32 = reference_forward(x, adj, params)
    assert jnp.allclose(h, h_f32, atol=1e-1, rtol=1e-1), "h diverged from f32 reference"
    assert jnp.allclose(out, out_f32, atol=1e-1, rtol=1e-1), "out diverged from f32 reference"

    print("KERNEL_OK")
</pallas_src>

<mosaic_0001>
module attributes {stable_mosaic.version = 11 : i64} {
  func.func @_sage_kernel(%arg0: memref<128x128xbf16, #tpu.memory_space<vmem>>, %arg1: memref<128x128xbf16, #tpu.memory_space<vmem>>, %arg2: memref<128x128xbf16, #tpu.memory_space<vmem>>, %arg3: memref<1x128xf32, #tpu.memory_space<vmem>>, %arg4: memref<2x256x128xbf16, #tpu.memory_space<vmem>>, %arg5: memref<2x128xf32, #tpu.memory_space<vmem>>, %arg6: memref<2x128xf32, #tpu.memory_space<vmem>>, %arg7: memref<2x128xf32, #tpu.memory_space<vmem>>, %arg8: memref<128x128xbf16, #tpu.memory_space<vmem>>, %arg9: memref<1x128xf32, #tpu.memory_space<vmem>>, %arg10: memref<128x128xf32, #tpu.memory_space<vmem>>, %arg11: memref<128x128xf32, #tpu.memory_space<vmem>>, %arg12: memref<128x256xbf16, #tpu.memory_space<vmem>>) attributes {dimension_semantics = [], scalar_prefetch = 0 : i64, scratch_operands = 1 : i64, tpu.core_type = #tpu.core_type<tc>} {
    %c0 = arith.constant 0 : index
    %c0_0 = arith.constant 0 : index
    %0 = vector.load %arg1[%c0, %c0_0] : memref<128x128xbf16, #tpu.memory_space<vmem>>, vector<128x128xbf16>
    %1 = tpu.iota {dimensions = array<i32: 0>} : vector<128x128xi32>
    %c64_i32 = arith.constant 64 : i32
    %2 = vector.broadcast %c64_i32 : i32 to vector<128x128xi32>
    %3 = arith.cmpi slt, %1, %2 : vector<128x128xi32>
    %4 = arith.extui %3 : vector<128x128xi1> to vector<128x128xi32>
    %5 = arith.sitofp %4 : vector<128x128xi32> to vector<128x128xf32>
    %c0_1 = arith.constant 0 : index
    %c0_2 = arith.constant 0 : index
    %6 = vector.load %arg0[%c0_1, %c0_2] : memref<128x128xbf16, #tpu.memory_space<vmem>>, vector<128x128xbf16>
    %c0_3 = arith.constant 0 : index
    %c0_4 = arith.constant 0 : index
    %7 = vector.load %arg2[%c0_3, %c0_4] : memref<128x128xbf16, #tpu.memory_space<vmem>>, vector<128x128xbf16>
    %cst = arith.constant dense<0.000000e+00> : vector<128x128xf32>
    %8 = tpu.matmul %6, %7, %cst {dimension_numbers = #tpu.dot_dimension_numbers<[1], [0], [0], [1], [0, 0, 1, 1], [], []>} : vector<128x128xbf16>, vector<128x128xbf16>, vector<128x128xf32> -> vector<128x128xf32>
    %c0_5 = arith.constant 0 : index
    %c0_6 = arith.constant 0 : index
    %9 = vector.load %arg3[%c0_5, %c0_6] : memref<1x128xf32, #tpu.memory_space<vmem>>, vector<1x128xf32>
    %10 = vector.broadcast %9 : vector<1x128xf32> to vector<128x128xf32>
    %11 = arith.addf %8, %10 : vector<128x128xf32>
    %cst_7 = arith.constant 0.000000e+00 : f32
    %12 = vector.broadcast %cst_7 : f32 to vector<128x128xf32>
    %13 = arith.maximumf %11, %12 : vector<128x128xf32>
    %14 = arith.truncf %13 : vector<128x128xf32> to vector<128x128xbf16>
    %cst_8 = arith.constant dense<0.000000e+00> : vector<128x128xf32>
    %15 = tpu.matmul %0, %14, %cst_8 {dimension_numbers = #tpu.dot_dimension_numbers<[1], [0], [0], [1], [0, 0, 1, 1], [], []>} : vector<128x128xbf16>, vector<128x128xbf16>, vector<128x128xf32> -> vector<128x128xf32>
    %16 = arith.truncf %15 : vector<128x128xf32> to vector<128x128xbf16>
    %c0_9 = arith.constant 0 : index
    %c0_10 = arith.constant 0 : index
    %17 = vector.load %arg12[%c0_9, %c0_10] : memref<128x256xbf16, #tpu.memory_space<vmem>>, vector<128x128xbf16>
    tpu.vector_store %arg12[%c0_9, %c0_10], %16 {strides = array<i32>} : memref<128x256xbf16, #tpu.memory_space<vmem>>, vector<128x128xbf16>,
    %c0_11 = arith.constant 0 : index
    %c128 = arith.constant 128 : index
    %18 = vector.load %arg12[%c0_11, %c128] : memref<128x256xbf16, #tpu.memory_space<vmem>>, vector<128x128xbf16>
    tpu.vector_store %arg12[%c0_11, %c128], %14 {strides = array<i32>} : memref<128x256xbf16, #tpu.memory_space<vmem>>, vector<128x128xbf16>,
    %c0_12 = arith.constant 0 : index
    %c0_13 = arith.constant 0 : index
    %19 = vector.load %arg12[%c0_12, %c0_13] : memref<128x256xbf16, #tpu.memory_space<vmem>>, vector<128x256xbf16>
    %c0_14 = arith.constant 0 : index
    %c0_15 = arith.constant 0 : index
    %c0_16 = arith.constant 0 : index
    %20 = vector.load %arg4[%c0_14, %c0_15, %c0_16] : memref<2x256x128xbf16, #tpu.memory_space<vmem>>, vector<1x256x128xbf16>
    %21 = vector.shape_cast %20 : vector<1x256x128xbf16> to vector<256x128xbf16>
    %cst_17 = arith.constant dense<0.000000e+00> : vector<128x128xf32>
    %22 = tpu.matmul %19, %21, %cst_17 {dimension_numbers = #tpu.dot_dimension_numbers<[1], [0], [0], [1], [0, 0, 1, 1], [], []>} : vector<128x256xbf16>, vector<256x128xbf16>, vector<128x128xf32> -> vector<128x128xf32>
    %c0_18 = arith.constant 0 : index
    %c0_19 = arith.constant 0 : index
    %23 = vector.load %arg5[%c0_18, %c0_19] : memref<2x128xf32, #tpu.memory_space<vmem>>, vector<1x128xf32>
    %24 = vector.broadcast %23 : vector<1x128xf32> to vector<128x128xf32>
    %25 = arith.addf %22, %24 : vector<128x128xf32>
    %26 = arith.mulf %25, %5 : vector<128x128xf32>
    %cst_20 = arith.constant dense<0.000000e+00> : vector<128xf32>
    %27 = vector.multi_reduction <add>, %26, %cst_20 [0] : vector<128x128xf32> to vector<128xf32>
    %28 = vector.shape_cast %27 : vector<128xf32> to vector<1x128xf32>
    %cst_21 = arith.constant 6.400000e+01 : f32
    %29 = vector.broadcast %cst_21 : f32 to vector<1x128xf32>
    %30 = arith.divf %28, %29 : vector<1x128xf32>
    %31 = vector.broadcast %30 : vector<1x128xf32> to vector<128x128xf32>
    %32 = arith.subf %25, %31 : vector<128x128xf32>
    %33 = arith.mulf %32, %5 : vector<128x128xf32>
    %34 = arith.mulf %33, %33 : vector<128x128xf32>
    %cst_22 = arith.constant dense<0.000000e+00> : vector<128xf32>
    %35 = vector.multi_reduction <add>, %34, %cst_22 [0] : vector<128x128xf32> to vector<128xf32>
    %36 = vector.shape_cast %35 : vector<128xf32> to vector<1x128xf32>
    %cst_23 = arith.constant 6.400000e+01 : f32
    %37 = vector.broadcast %cst_23 : f32 to vector<1x128xf32>
    %38 = arith.divf %36, %37 : vector<1x128xf32>
    %c0_24 = arith.constant 0 : index
    %c0_25 = arith.constant 0 : index
    %39 = vector.load %arg6[%c0_24, %c0_25] : memref<2x128xf32, #tpu.memory_space<vmem>>, vector<1x128xf32>
    %cst_26 = arith.constant 9.99999974E-6 : f32
    %40 = vector.broadcast %cst_26 : f32 to vector<1x128xf32>
    %41 = arith.addf %38, %40 : vector<1x128xf32>
    %42 = math.rsqrt %41 : vector<1x128xf32>
    %43 = arith.mulf %39, %42 : vector<1x128xf32>
    %c0_27 = arith.constant 0 : index
    %c0_28 = arith.constant 0 : index
    %44 = vector.load %arg7[%c0_27, %c0_28] : memref<2x128xf32, #tpu.memory_space<vmem>>, vector<1x128xf32>
    %45 = arith.mulf %30, %43 : vector<1x128xf32>
    %46 = arith.subf %44, %45 : vector<1x128xf32>
    %47 = vector.broadcast %43 : vector<1x128xf32> to vector<128x128xf32>
    %48 = arith.mulf %25, %47 : vector<128x128xf32>
    %49 = vector.broadcast %46 : vector<1x128xf32> to vector<128x128xf32>
    %50 = arith.addf %48, %49 : vector<128x128xf32>
    %cst_29 = arith.constant 0.000000e+00 : f32
    %51 = vector.broadcast %cst_29 : f32 to vector<128x128xf32>
    %52 = arith.maximumf %50, %51 : vector<128x128xf32>
    %53 = arith.truncf %52 : vector<128x128xf32> to vector<128x128xbf16>
    %cst_30 = arith.constant dense<0.000000e+00> : vector<128x128xf32>
    %54 = tpu.matmul %0, %53, %cst_30 {dimension_numbers = #tpu.dot_dimension_numbers<[1], [0], [0], [1], [0, 0, 1, 1], [], []>} : vector<128x128xbf16>, vector<128x128xbf16>, vector<128x128xf32> -> vector<128x128xf32>
    %55 = arith.truncf %54 : vector<128x128xf32> to vector<128x128xbf16>
    %c0_31 = arith.constant 0 : index
    %c0_32 = arith.constant 0 : index
    %56 = vector.load %arg12[%c0_31, %c0_32] : memref<128x256xbf16, #tpu.memory_space<vmem>>, vector<128x128xbf16>
    tpu.vector_store %arg12[%c0_31, %c0_32], %55 {strides = array<i32>} : memref<128x256xbf16, #tpu.memory_space<vmem>>, vector<128x128xbf16>,
    %c0_33 = arith.constant 0 : index
    %c128_34 = arith.constant 128 : index
    %57 = vector.load %arg12[%c0_33, %c128_34] : memref<128x256xbf16, #tpu.memory_space<vmem>>, vector<128x128xbf16>
    tpu.vector_store %arg12[%c0_33, %c128_34], %53 {strides = array<i32>} : memref<128x256xbf16, #tpu.memory_space<vmem>>, vector<128x128xbf16>,
    %c0_35 = arith.constant 0 : index
    %c0_36 = arith.constant 0 : index
    %58 = vector.load %arg12[%c0_35, %c0_36] : memref<128x256xbf16, #tpu.memory_space<vmem>>, vector<128x256xbf16>
    %c1 = arith.constant 1 : index
    %c0_37 = arith.constant 0 : index
    %c0_38 = arith.constant 0 : index
    %59 = vector.load %arg4[%c1, %c0_37, %c0_38] : memref<2x256x128xbf16, #tpu.memory_space<vmem>>, vector<1x256x128xbf16>
    %60 = vector.shape_cast %59 : vector<1x256x128xbf16> to vector<256x128xbf16>
    %cst_39 = arith.constant dense<0.000000e+00> : vector<128x128xf32>
    %61 = tpu.matmul %58, %60, %cst_39 {dimension_numbers = #tpu.dot_dimension_numbers<[1], [0], [0], [1], [0, 0, 1, 1], [], []>} : vector<128x256xbf16>, vector<256x128xbf16>, vector<128x128xf32> -> vector<128x128xf32>
    %c1_40 = arith.constant 1 : index
    %c0_41 = arith.constant 0 : index
    %62 = vector.load %arg5[%c1_40, %c0_41] : memref<2x128xf32, #tpu.memory_space<vmem>>, vector<1x128xf32>
    %63 = vector.broadcast %62 : vector<1x128xf32> to vector<128x128xf32>
    %64 = arith.addf %61, %63 : vector<128x128xf32>
    %c0_42 = arith.constant 0 : index
    %c0_43 = arith.constant 0 : index
    %65 = vector.load %arg10[%c0_42, %c0_43] : memref<128x128xf32, #tpu.memory_space<vmem>>, vector<128x128xf32>
    tpu.vector_store %arg10[%c0_42, %c0_43], %64 {strides = array<i32>} : memref<128x128xf32, #tpu.memory_space<vmem>>, vector<128x128xf32>,
    %66 = arith.mulf %64, %5 : vector<128x128xf32>
    %cst_44 = arith.constant dense<0.000000e+00> : vector<128xf32>
    %67 = vector.multi_reduction <add>, %66, %cst_44 [0] : vector<128x128xf32> to vector<128xf32>
    %68 = vector.shape_cast %67 : vector<128xf32> to vector<1x128xf32>
    %cst_45 = arith.constant 6.400000e+01 : f32
    %69 = vector.broadcast %cst_45 : f32 to vector<1x128xf32>
    %70 = arith.divf %68, %69 : vector<1x128xf32>
    %71 = vector.broadcast %70 : vector<1x128xf32> to vector<128x128xf32>
    %72 = arith.subf %64, %71 : vector<128x128xf32>
    %73 = arith.mulf %72, %5 : vector<128x128xf32>
    %74 = arith.mulf %73, %73 : vector<128x128xf32>
    %cst_46 = arith.constant dense<0.000000e+00> : vector<128xf32>
    %75 = vector.multi_reduction <add>, %74, %cst_46 [0] : vector<128x128xf32> to vector<128xf32>
    %76 = vector.shape_cast %75 : vector<128xf32> to vector<1x128xf32>
    %cst_47 = arith.constant 6.400000e+01 : f32
    %77 = vector.broadcast %cst_47 : f32 to vector<1x128xf32>
    %78 = arith.divf %76, %77 : vector<1x128xf32>
    %c1_48 = arith.constant 1 : index
    %c0_49 = arith.constant 0 : index
    %79 = vector.load %arg6[%c1_48, %c0_49] : memref<2x128xf32, #tpu.memory_space<vmem>>, vector<1x128xf32>
    %cst_50 = arith.constant 9.99999974E-6 : f32
    %80 = vector.broadcast %cst_50 : f32 to vector<1x128xf32>
    %81 = arith.addf %78, %80 : vector<1x128xf32>
    %82 = math.rsqrt %81 : vector<1x128xf32>
    %83 = arith.mulf %79, %82 : vector<1x128xf32>
    %c1_51 = arith.constant 1 : index
    %c0_52 = arith.constant 0 : index
    %84 = vector.load %arg7[%c1_51, %c0_52] : memref<2x128xf32, #tpu.memory_space<vmem>>, vector<1x128xf32>
    %85 = arith.mulf %70, %83 : vector<1x128xf32>
    %86 = arith.subf %84, %85 : vector<1x128xf32>
    %87 = vector.broadcast %83 : vector<1x128xf32> to vector<128x128xf32>
    %88 = arith.mulf %64, %87 : vector<128x128xf32>
    %89 = vector.broadcast %86 : vector<1x128xf32> to vector<128x128xf32>
    %90 = arith.addf %88, %89 : vector<128x128xf32>
    %cst_53 = arith.constant 0.000000e+00 : f32
    %91 = vector.broadcast %cst_53 : f32 to vector<128x128xf32>
    %92 = arith.maximumf %90, %91 : vector<128x128xf32>
    %93 = arith.truncf %92 : vector<128x128xf32> to vector<128x128xbf16>
    %c0_54 = arith.constant 0 : index
    %c0_55 = arith.constant 0 : index
    %94 = vector.load %arg8[%c0_54, %c0_55] : memref<128x128xbf16, #tpu.memory_space<vmem>>, vector<128x128xbf16>
    %cst_56 = arith.constant dense<0.000000e+00> : vector<128x128xf32>
    %95 = tpu.matmul %93, %94, %cst_56 {dimension_numbers = #tpu.dot_dimension_numbers<[1], [0], [0], [1], [0, 0, 1, 1], [], []>} : vector<128x128xbf16>, vector<128x128xbf16>, vector<128x128xf32> -> vector<128x128xf32>
    %c0_57 = arith.constant 0 : index
    %c0_58 = arith.constant 0 : index
    %96 = vector.load %arg9[%c0_57, %c0_58] : memref<1x128xf32, #tpu.memory_space<vmem>>, vector<1x128xf32>
    %97 = vector.broadcast %96 : vector<1x128xf32> to vector<128x128xf32>
    %98 = arith.addf %95, %97 : vector<128x128xf32>
    %c0_59 = arith.constant 0 : index
    %c0_60 = arith.constant 0 : index
    %99 = vector.load %arg11[%c0_59, %c0_60] : memref<128x128xf32, #tpu.memory_space<vmem>>, vector<128x128xf32>
    tpu.vector_store %arg11[%c0_59, %c0_60], %98 {strides = array<i32>} : memref<128x128xf32, #tpu.memory_space<vmem>>, vector<128x128xf32>,
    return
  }
}

</mosaic_0001>

<llo_original>
// kernel: tpu_custom_call.1
$region0: #{tpu_custom_call.1}
  #allocation0 [shape = 'u32[]', space=smem, size = 0x4, offset = 0x4, fixed_abs, tag = 'smem constant byte address 0x4 - core index']
  #allocation1 [shape = 'u32[144,128]{1,0:T(1,128)}', space=vmem, size = 0x12000, scoped, tag = 'internal scratch']
  #allocation2 [shape = 'bf16[128,256]{1,0:T(16,128)(2,1)}', space=vmem, size = 0x10000, scoped, tag = 'scratch operand']
  %s0 = inlined_call_operand.hbm [shape: bf16[128,128], index: 0, kind: input, shape index: {}]
  %s1 = inlined_call_operand.hbm [shape: bf16[128,128], index: 1, kind: input, shape index: {}]
  %s2 = inlined_call_operand.hbm [shape: bf16[128,128], index: 2, kind: input, shape index: {}]
  %s3 = inlined_call_operand.hbm [shape: f32[1,128], index: 3, kind: input, shape index: {}]
  %s4 = inlined_call_operand.hbm [shape: bf16[2,256,128], index: 4, kind: input, shape index: {}]
  %s5 = inlined_call_operand.hbm [shape: f32[2,128], index: 5, kind: input, shape index: {}]
  %s6 = inlined_call_operand.hbm [shape: f32[2,128], index: 6, kind: input, shape index: {}]
  %s7 = inlined_call_operand.hbm [shape: f32[2,128], index: 7, kind: input, shape index: {}]
  %s8 = inlined_call_operand.hbm [shape: bf16[128,128], index: 8, kind: input, shape index: {}]
  %s9 = inlined_call_operand.hbm [shape: f32[1,128], index: 9, kind: input, shape index: {}]
  %s10 = inlined_call_operand.hbm [shape: f32[128,128], index: 10, kind: output, shape index: {0}]
  %s11 = inlined_call_operand.hbm [shape: f32[128,128], index: 11, kind: output, shape index: {1}]
  %12 = xla_tuple %s10, %s11
  %s13 = sld [smem:[#allocation0]]
  $region98: #{tpu_custom_call.1} parent=0
    _
  %s15 = ssub.s32 1, %s13
  %s16 = scalar_select 0, %s15, %s13
  $region1: #{tpu_custom_call.1} parent=0
    #allocation3 [shape = 'u8[32768]{0}', space=vmem, size = 0x8000, scoped, tag = 'input window, operand 0, single buffered']
    #allocation4 [shape = 's32[1]{0}', space=sflag, size = 0x4, scoped, tag = 'scoped memory for tpu_custom_call.1']
    #allocation5 [shape = 's32[1]{0}', space=sflag, size = 0x4, scoped, tag = 'scoped memory for tpu_custom_call.1']
    #allocation6 [shape = 'u8[32768]{0}', space=vmem, size = 0x8000, scoped, tag = 'input window, operand 1, single buffered']
    #allocation7 [shape = 's32[1]{0}', space=sflag, size = 0x4, scoped, tag = 'scoped memory for tpu_custom_call.1']
    #allocation8 [shape = 'u8[32768]{0}', space=vmem, size = 0x8000, scoped, tag = 'input window, operand 2, single buffered']
    #allocation9 [shape = 'u8[512]{0}', space=vmem, size = 0x400, scoped, tag = 'input window, operand 3, single buffered']
    #allocation10 [shape = 's32[1]{0}', space=sflag, size = 0x4, scoped, tag = 'scoped memory for tpu_custom_call.1']
    #allocation11 [shape = 'u8[131072]{0}', space=vmem, size = 0x20000, scoped, tag = 'input window, operand 4, single buffered']
    #allocation12 [shape = 'u8[1024]{0}', space=vmem, size = 0x400, scoped, tag = 'input window, operand 5, single buffered']
    #allocation13 [shape = 's32[1]{0}', space=sflag, size = 0x4, scoped, tag = 'scoped memory for tpu_custom_call.1']
    #allocation14 [shape = 'u8[1024]{0}', space=vmem, size = 0x400, scoped, tag = 'input window, operand 6, single buffered']
    #allocation15 [shape = 'u8[1024]{0}', space=vmem, size = 0x400, scoped, tag = 'input window, operand 7, single buffered']
    #allocation16 [shape = 's32[1]{0}', space=sflag, size = 0x4, scoped, tag = 'scoped memory for tpu_custom_call.1']
    #allocation17 [shape = 'u8[32768]{0}', space=vmem, size = 0x8000, scoped, tag = 'input window, operand 8, single buffered']
    #allocation18 [shape = 'u8[512]{0}', space=vmem, size = 0x400, scoped, tag = 'input window, operand 9, single buffered']
    #allocation19 [shape = 's32[1]{0}', space=sflag, size = 0x4, scoped, tag = 'scoped memory for tpu_custom_call.1']
    #allocation20 [shape = 'u8[65536]{0}', space=vmem, size = 0x10000, scoped, tag = 'output window, operand 0, single buffered']
    #allocation21 [shape = 'u8[65536]{0}', space=vmem, size = 0x10000, scoped, tag = 'output window, operand 1, single buffered']
    #allocation22 [shape = 's32[1]{0}', space=sflag, size = 0x4, scoped, tag = 'scoped memory for tpu_custom_call.1']
    %17 = vsyncpa [#allocation4], 0
    %18 = vsyncpa [#allocation7], 0
    %19 = vsyncpa [#allocation10], 0
    %20 = vsyncpa [#allocation13], 0
    %21 = vsyncpa [#allocation16], 0
    %22 = vsyncpa [#allocation19], 0
    %23 = vsyncpa [#allocation5], 0
    %24 = vsyncpa [#allocation22], 0
    // Predicated region
    $region2: #{tpu_custom_call.1} parent=1 // pred_check
      _
    $region3: #{tpu_custom_call.1} parent=1 // pred_check_branch
      %26 = sbr.rel (0) target = $region5
    $region4: #{tpu_custom_call.1} parent=1 // pred_region
      %s28 = ssub.s32 1024, 1024
      %29 = vsyncadd [#allocation4], %s28
      %s30 = sshll.u32 [#allocation3], 4
      %s31 = int_to_ptr.vmem [resolvable:$true] %s30
      %36 = dma.hbm_to_vmem [thread:$0]  %s0, 1024, %s31, [#allocation4], 64, 64, 4
    $region5: #{tpu_custom_call.1} parent=1 // pred_fallthru
      _
    // Predicated region
    $region6: #{tpu_custom_call.1} parent=1 // pred_check
      _
    $region7: #{tpu_custom_call.1} parent=1 // pred_check_branch
      %38 = sbr.rel (0) target = $region9
    $region8: #{tpu_custom_call.1} parent=1 // pred_region
      %s40 = ssub.s32 1024, 1024
      %41 = vsyncadd [#allocation7], %s40
      %s42 = sshll.u32 [#allocation6], 4
      %s43 = int_to_ptr.vmem [resolvable:$true] %s42
      %48 = dma.hbm_to_vmem [thread:$0]  %s1, 1024, %s43, [#allocation7], 64, 64, 4
    $region9: #{tpu_custom_call.1} parent=1 // pred_fallthru
      _
    // Predicated region
    $region10: #{tpu_custom_call.1} parent=1 // pred_check
      _
    $region11: #{tpu_custom_call.1} parent=1 // pred_check_branch
      %50 = sbr.rel (0) target = $region13
    $region12: #{tpu_custom_call.1} parent=1 // pred_region
      %s52 = ssub.s32 1024, 1024
      %53 = vsyncadd [#allocation7], %s52
      %s54 = sshll.u32 [#allocation8], 4
      %s55 = int_to_ptr.vmem [resolvable:$true] %s54
      %60 = dma.hbm_to_vmem [thread:$0]  %s2, 1024, %s55, [#allocation7], 64, 64, 4
    $region13: #{tpu_custom_call.1} parent=1 // pred_fallthru
      _
    // Predicated region
    $region14: #{tpu_custom_call.1} parent=1 // pred_check
      _
    $region15: #{tpu_custom_call.1} parent=1 // pred_check_branch
      %62 = sbr.rel (0) target = $region17
    $region16: #{tpu_custom_call.1} parent=1 // pred_region
      %s64 = ssub.s32 16, 16
      %65 = vsyncadd [#allocation10], %s64
      %s67 = sshll.u32 [#allocation9], 4
      %s68 = int_to_ptr.vmem [resolvable:$true] %s67
      %70 = dma.hbm_to_vmem [thread:$0]  %s3, 16, %s68, [#allocation10]
    $region17: #{tpu_custom_call.1} parent=1 // pred_fallthru
      _
    // Predicated region
    $region18: #{tpu_custom_call.1} parent=1 // pred_check
      _
    $region19: #{tpu_custom_call.1} parent=1 // pred_check_branch
      %72 = sbr.rel (0) target = $region21
    $region20: #{tpu_custom_call.1} parent=1 // pred_region
      %s74 = ssub.s32 4096, 4096
      %75 = vsyncadd [#allocation10], %s74
      %s76 = sshll.u32 [#allocation11], 4
      %s77 = int_to_ptr.vmem [resolvable:$true] %s76
      %82 = dma.hbm_to_vmem [thread:$0]  %s4, 4096, %s77, [#allocation10], 64, 64, 4
    $region21: #{tpu_custom_call.1} parent=1 // pred_fallthru
      _
    // Predicated region
    $region22: #{tpu_custom_call.1} parent=1 // pred_check
      _
    $region23: #{tpu_custom_call.1} parent=1 // pred_check_branch
      %84 = sbr.rel (0) target = $region25
    $region24: #{tpu_custom_call.1} parent=1 // pred_region
      %s86 = ssub.s32 32, 32
      %87 = vsyncadd [#allocation13], %s86
      %s89 = sshll.u32 [#allocation12], 4
      %s90 = int_to_ptr.vmem [resolvable:$true] %s89
      %92 = dma.hbm_to_vmem [thread:$0]  %s5, 32, %s90, [#allocation13]
    $region25: #{tpu_custom_call.1} parent=1 // pred_fallthru
      _
    // Predicated region
    $region26: #{tpu_custom_call.1} parent=1 // pred_check
      _
    $region27: #{tpu_custom_call.1} parent=1 // pred_check_branch
      %94 = sbr.rel (0) target = $region29
    $region28: #{tpu_custom_call.1} parent=1 // pred_region
      %s96 = ssub.s32 32, 32
      %97 = vsyncadd [#allocation13], %s96
      %s99 = sshll.u32 [#allocation14], 4
      %s100 = int_to_ptr.vmem [resolvable:$true] %s99
      %102 = dma.hbm_to_vmem [thread:$0]  %s6, 32, %s100, [#allocation13]
    $region29: #{tpu_custom_call.1} parent=1 // pred_fallthru
      _
    // Predicated region
    $region30: #{tpu_custom_call.1} parent=1 // pred_check
      _
    $region31: #{tpu_custom_call.1} parent=1 // pred_check_branch
      %104 = sbr.rel (0) target = $region33
    $region32: #{tpu_custom_call.1} parent=1 // pred_region
      %s106 = ssub.s32 32, 32
      %107 = vsyncadd [#allocation16], %s106
      %s109 = sshll.u32 [#allocation15], 4
      %s110 = int_to_ptr.vmem [resolvable:$true] %s109
      %112 = dma.hbm_to_vmem [thread:$0]  %s7, 32, %s110, [#allocation16]
    $region33: #{tpu_custom_call.1} parent=1 // pred_fallthru
      _
    // Predicated region
    $region34: #{tpu_custom_call.1} parent=1 // pred_check
      _
    $region35: #{tpu_custom_call.1} parent=1 // pred_check_branch
      %114 = sbr.rel (0) target = $region37
    $region36: #{tpu_custom_call.1} parent=1 // pred_region
      %s116 = ssub.s32 1024, 1024
      %117 = vsyncadd [#allocation16], %s116
      %s118 = sshll.u32 [#allocation17], 4
      %s119 = int_to_ptr.vmem [resolvable:$true] %s118
      %124 = dma.hbm_to_vmem [thread:$0]  %s8, 1024, %s119, [#allocation16], 64, 64, 4
    $region37: #{tpu_custom_call.1} parent=1 // pred_fallthru
      _
    // Predicated region
    $region38: #{tpu_custom_call.1} parent=1 // pred_check
      _
    $region39: #{tpu_custom_call.1} parent=1 // pred_check_branch
      %126 = sbr.rel (0) target = $region41
    $region40: #{tpu_custom_call.1} parent=1 // pred_region
      %s128 = ssub.s32 16, 16
      %129 = vsyncadd [#allocation19], %s128
      %s131 = sshll.u32 [#allocation18], 4
      %s132 = int_to_ptr.vmem [resolvable:$true] %s131
      %134 = dma.hbm_to_vmem [thread:$0]  %s9, 16, %s132, [#allocation19]
    $region41: #{tpu_custom_call.1} parent=1 // pred_fallthru
      _
    // Predicated region
    $region42: #{tpu_custom_call.1} parent=1 // pred_check
      _
    $region43: #{tpu_custom_call.1} parent=1 // pred_check_branch
      %136 = sbr.rel (0) target = $region45
    $region44: #{tpu_custom_call.1} parent=1 // pred_region
      %137 = dma.done [#allocation4], 1024
    $region45: #{tpu_custom_call.1} parent=1 // pred_fallthru
      _
    // Predicated region
    $region46: #{tpu_custom_call.1} parent=1 // pred_check
      _
    $region47: #{tpu_custom_call.1} parent=1 // pred_check_branch
      %139 = sbr.rel (0) target = $region49
    $region48: #{tpu_custom_call.1} parent=1 // pred_region
      %140 = dma.done [#allocation7], 1024
    $region49: #{tpu_custom_call.1} parent=1 // pred_fallthru
      _
    // Predicated region
    $region50: #{tpu_custom_call.1} parent=1 // pred_check
      _
    $region51: #{tpu_custom_call.1} parent=1 // pred_check_branch
      %142 = sbr.rel (0) target = $region53
    $region52: #{tpu_custom_call.1} parent=1 // pred_region
      %143 = dma.done [#allocation7], 1024
    $region53: #{tpu_custom_call.1} parent=1 // pred_fallthru
      _
    // Predicated region
    $region54: #{tpu_custom_call.1} parent=1 // pred_check
      _
    $region55: #{tpu_custom_call.1} parent=1 // pred_check_branch
      %145 = sbr.rel (0) target = $region57
    $region56: #{tpu_custom_call.1} parent=1 // pred_region
      %146 = dma.done [#allocation10], 16
    $region57: #{tpu_custom_call.1} parent=1 // pred_fallthru
      _
    // Predicated region
    $region58: #{tpu_custom_call.1} parent=1 // pred_check
      _
    $region59: #{tpu_custom_call.1} parent=1 // pred_check_branch
      %148 = sbr.rel (0) target = $region61
    $region60: #{tpu_custom_call.1} parent=1 // pred_region
      %149 = dma.done [#allocation10], 4096
    $region61: #{tpu_custom_call.1} parent=1 // pred_fallthru
      _
    // Predicated region
    $region62: #{tpu_custom_call.1} parent=1 // pred_check
      _
    $region63: #{tpu_custom_call.1} parent=1 // pred_check_branch
      %151 = sbr.rel (0) target = $region65
    $region64: #{tpu_custom_call.1} parent=1 // pred_region
      %152 = dma.done [#allocation13], 32
    $region65: #{tpu_custom_call.1} parent=1 // pred_fallthru
      _
    // Predicated region
    $region66: #{tpu_custom_call.1} parent=1 // pred_check
      _
    $region67: #{tpu_custom_call.1} parent=1 // pred_check_branch
      %154 = sbr.rel (0) target = $region69
    $region68: #{tpu_custom_call.1} parent=1 // pred_region
      %155 = dma.done [#allocation13], 32
    $region69: #{tpu_custom_call.1} parent=1 // pred_fallthru
      _
    // Predicated region
    $region70: #{tpu_custom_call.1} parent=1 // pred_check
      _
    $region71: #{tpu_custom_call.1} parent=1 // pred_check_branch
      %157 = sbr.rel (0) target = $region73
    $region72: #{tpu_custom_call.1} parent=1 // pred_region
      %158 = dma.done [#allocation16], 32
    $region73: #{tpu_custom_call.1} parent=1 // pred_fallthru
      _
    // Predicated region
    $region74: #{tpu_custom_call.1} parent=1 // pred_check
      _
    $region75: #{tpu_custom_call.1} parent=1 // pred_check_branch
      %160 = sbr.rel (0) target = $region77
    $region76: #{tpu_custom_call.1} parent=1 // pred_region
      %161 = dma.done [#allocation16], 1024
    $region77: #{tpu_custom_call.1} parent=1 // pred_fallthru
      _
    // Predicated region
    $region78: #{tpu_custom_call.1} parent=1 // pred_check
      _
    $region79: #{tpu_custom_call.1} parent=1 // pred_check_branch
      %163 = sbr.rel (0) target = $region81
    $region80: #{tpu_custom_call.1} parent=1 // pred_region
      %164 = dma.done [#allocation19], 16
    $region81: #{tpu_custom_call.1} parent=1 // pred_fallthru
      _
    %v166 = vld [vmem:[#allocation6] sm:$0xf]
    %v167 = vld [vmem:[#allocation6 + $0x4] sm:$0xf]
    %v168 = vld [vmem:[#allocation6 + $0x8] sm:$0xf]
    %v169 = vld [vmem:[#allocation6 + $0xc] sm:$0xf]
    %v170 = vld [vmem:[#allocation6 + $0x10] sm:$0xf]
    %v171 = vld [vmem:[#allocation6 + $0x14] sm:$0xf]
    %v172 = vld [vmem:[#allocation6 + $0x18] sm:$0xf]
    %v173 = vld [vmem:[#allocation6 + $0x1c] sm:$0xf]
    %v174 = vld [vmem:[#allocation6 + $0x20] sm:$0xf]
    %v175 = vld [vmem:[#allocation6 + $0x24] sm:$0xf]
    %v176 = vld [vmem:[#allocation6 + $0x28] sm:$0xf]
    %v177 = vld [vmem:[#allocation6 + $0x2c] sm:$0xf]
    %v178 = vld [vmem:[#allocation6 + $0x30] sm:$0xf]
    %v179 = vld [vmem:[#allocation6 + $0x34] sm:$0xf]
    %v180 = vld [vmem:[#allocation6 + $0x38] sm:$0xf]
    %v181 = vld [vmem:[#allocation6 + $0x3c] sm:$0xf]
    %v182 = vlaneseq
    %v183 = vshrl.u32 %v182, 7
    %v184 = vadd.s32 %v183, 8
    %v185 = vadd.s32 %v183, 16
    %v186 = vadd.s32 %v183, 24
    %v187 = vadd.s32 %v183, 32
    %v188 = vadd.s32 %v183, 40
    %v189 = vadd.s32 %v183, 48
    %v190 = vadd.s32 %v183, 56
    %v191 = vadd.s32 %v183, 64
    %v192 = vadd.s32 %v183, 72
    %v193 = vadd.s32 %v183, 80
    %v194 = vadd.s32 %v183, 88
    %v195 = vadd.s32 %v183, 96
    %v196 = vadd.s32 %v183, 104
    %v197 = vadd.s32 %v183, 112
    %v198 = vadd.s32 %v183, 120
    %vm199 = vcmp.lt.s32.totalorder %v183, 64
    %vm200 = vcmp.lt.s32.totalorder %v184, 64
    %vm201 = vcmp.lt.s32.totalorder %v185, 64
    %vm202 = vcmp.lt.s32.totalorder %v186, 64
    %vm203 = vcmp.lt.s32.totalorder %v187, 64
    %vm204 = vcmp.lt.s32.totalorder %v188, 64
    %vm205 = vcmp.lt.s32.totalorder %v189, 64
    %vm206 = vcmp.lt.s32.totalorder %v190, 64
    %vm207 = vcmp.lt.s32.totalorder %v191, 64
    %vm208 = vcmp.lt.s32.totalorder %v192, 64
    %vm209 = vcmp.lt.s32.totalorder %v193, 64
    %vm210 = vcmp.lt.s32.totalorder %v194, 64
    %vm211 = vcmp.lt.s32.totalorder %v195, 64
    %vm212 = vcmp.lt.s32.totalorder %v196, 64
    %vm213 = vcmp.lt.s32.totalorder %v197, 64
    %vm214 = vcmp.lt.s32.totalorder %v198, 64
    %v215 = vsel %vm199, 1, 0
    %v216 = vsel %vm200, 1, 0
    %v217 = vsel %vm201, 1, 0
    %v218 = vsel %vm202, 1, 0
    %v219 = vsel %vm203, 1, 0
    %v220 = vsel %vm204, 1, 0
    %v221 = vsel %vm205, 1, 0
    %v222 = vsel %vm206, 1, 0
    %v223 = vsel %vm207, 1, 0
    %v224 = vsel %vm208, 1, 0
    %v225 = vsel %vm209, 1, 0
    %v226 = vsel %vm210, 1, 0
    %v227 = vsel %vm211, 1, 0
    %v228 = vsel %vm212, 1, 0
    %v229 = vsel %vm213, 1, 0
    %v230 = vsel %vm214, 1, 0
    %v231 = vcvt.s32.f32 %v215
    %v232 = vcvt.s32.f32 %v216
    %v233 = vcvt.s32.f32 %v217
    %v234 = vcvt.s32.f32 %v218
    %v235 = vcvt.s32.f32 %v219
    %v236 = vcvt.s32.f32 %v220
    %v237 = vcvt.s32.f32 %v221
    %v238 = vcvt.s32.f32 %v222
    %v239 = vcvt.s32.f32 %v223
    %v240 = vcvt.s32.f32 %v224
    %v241 = vcvt.s32.f32 %v225
    %v242 = vcvt.s32.f32 %v226
    %v243 = vcvt.s32.f32 %v227
    %v244 = vcvt.s32.f32 %v228
    %v245 = vcvt.s32.f32 %v229
    %v246 = vcvt.s32.f32 %v230
    %v247 = vld [vmem:[#allocation3] sm:$0xf]
    %v248 = vld [vmem:[#allocation3 + $0x4] sm:$0xf]
    %v249 = vld [vmem:[#allocation3 + $0x8] sm:$0xf]
    %v250 = vld [vmem:[#allocation3 + $0xc] sm:$0xf]
    %v251 = vld [vmem:[#allocation3 + $0x10] sm:$0xf]
    %v252 = vld [vmem:[#allocation3 + $0x14] sm:$0xf]
    %v253 = vld [vmem:[#allocation3 + $0x18] sm:$0xf]
    %v254 = vld [vmem:[#allocation3 + $0x1c] sm:$0xf]
    %v255 = vld [vmem:[#allocation3 + $0x20] sm:$0xf]
    %v256 = vld [vmem:[#allocation3 + $0x24] sm:$0xf]
    %v257 = vld [vmem:[#allocation3 + $0x28] sm:$0xf]
    %v258 = vld [vmem:[#allocation3 + $0x2c] sm:$0xf]
    %v259 = vld [vmem:[#allocation3 + $0x30] sm:$0xf]
    %v260 = vld [vmem:[#allocation3 + $0x34] sm:$0xf]
    %v261 = vld [vmem:[#allocation3 + $0x38] sm:$0xf]
    %v262 = vld [vmem:[#allocation3 + $0x3c] sm:$0xf]
    %v263 = vld [vmem:[#allocation8] sm:$0xf]
    %v264 = vld [vmem:[#allocation8 + $0x4] sm:$0xf]
    %v265 = vld [vmem:[#allocation8 + $0x8] sm:$0xf]
    %v266 = vld [vmem:[#allocation8 + $0xc] sm:$0xf]
    %v267 = vld [vmem:[#allocation8 + $0x10] sm:$0xf]
    %v268 = vld [vmem:[#allocation8 + $0x14] sm:$0xf]
    %v269 = vld [vmem:[#allocation8 + $0x18] sm:$0xf]
    %v270 = vld [vmem:[#allocation8 + $0x1c] sm:$0xf]
    %v271 = vld [vmem:[#allocation8 + $0x20] sm:$0xf]
    %v272 = vld [vmem:[#allocation8 + $0x24] sm:$0xf]
    %v273 = vld [vmem:[#allocation8 + $0x28] sm:$0xf]
    %v274 = vld [vmem:[#allocation8 + $0x2c] sm:$0xf]
    %v275 = vld [vmem:[#allocation8 + $0x30] sm:$0xf]
    %v276 = vld [vmem:[#allocation8 + $0x34] sm:$0xf]
    %v277 = vld [vmem:[#allocation8 + $0x38] sm:$0xf]
    %v278 = vld [vmem:[#allocation8 + $0x3c] sm:$0xf]
    %v279 = vld [vmem:[#allocation9] sm:$0x1]
    %v281 = vlaneseq
    %v282 = vshrl.u32 %v281, 7
    %v283 = vsub.s32 0, %v282
    %v284 = vrot.slane %v279, %v283
    %v302 = vunpack.c.l.b16 %v247
    %v303 = vunpack.c.l.b16 %v248
    %v304 = vunpack.c.l.b16 %v249
    %v305 = vunpack.c.l.b16 %v250
    %v306 = vunpack.c.l.b16 %v251
    %v307 = vunpack.c.l.b16 %v252
    %v308 = vunpack.c.l.b16 %v253
    %v309 = vunpack.c.l.b16 %v254
    %v310 = vunpack.c.l.b16 %v255
    %v311 = vunpack.c.l.b16 %v256
    %v312 = vunpack.c.l.b16 %v257
    %v313 = vunpack.c.l.b16 %v258
    %v314 = vunpack.c.l.b16 %v259
    %v315 = vunpack.c.l.b16 %v260
    %v316 = vunpack.c.l.b16 %v261
    %v317 = vunpack.c.l.b16 %v262
    %v318 = vpack.c.b16 %v303, %v302
    %v319 = vpack.c.b16 %v305, %v304
    %v320 = vpack.c.b16 %v307, %v306
    %v321 = vpack.c.b16 %v309, %v308
    %v322 = vpack.c.b16 %v311, %v310
    %v323 = vpack.c.b16 %v313, %v312
    %v324 = vpack.c.b16 %v315, %v314
    %v325 = vpack.c.b16 %v317, %v316
    %v350 = vunpack.c.l.b16 %v263
    %v351 = vunpack.c.l.b16 %v264
    %v352 = vunpack.c.l.b16 %v265
    %v353 = vunpack.c.l.b16 %v266
    %v354 = vunpack.c.l.b16 %v267
    %v355 = vunpack.c.l.b16 %v268
    %v356 = vunpack.c.l.b16 %v269
    %v357 = vunpack.c.l.b16 %v270
    %v358 = vunpack.c.l.b16 %v271
    %v359 = vunpack.c.l.b16 %v272
    %v360 = vunpack.c.l.b16 %v273
    %v361 = vunpack.c.l.b16 %v274
    %v362 = vunpack.c.l.b16 %v275
    %v363 = vunpack.c.l.b16 %v276
    %v364 = vunpack.c.l.b16 %v277
    %v365 = vunpack.c.l.b16 %v278
    %v366 = vpack.c.b16 %v351, %v350
    %v367 = vpack.c.b16 %v353, %v352
    %v368 = vpack.c.b16 %v355, %v354
    %v369 = vpack.c.b16 %v357, %v356
    %v370 = vpack.c.b16 %v359, %v358
    %v371 = vpack.c.b16 %v361, %v360
    %v372 = vpack.c.b16 %v363, %v362
    %v373 = vpack.c.b16 %v365, %v364
    %382 = vmatprep.subr.bf16.mxu0 0
    %383 = vmatpush1.bf16.msra.mxu0 %v366
    %384 = vmatprep.subr.bf16.mxu0 0
    %385 = vmatpush1.bf16.msra.mxu0 %v367
    %386 = vmatprep.subr.bf16.mxu0 0
    %387 = vmatpush1.bf16.msra.mxu0 %v368
    %388 = vmatprep.subr.bf16.mxu0 0
    %389 = vmatpush1.bf16.msra.mxu0 %v369
    %390 = vmatprep.subr.bf16.mxu0 0
    %391 = vmatpush1.bf16.msra.mxu0 %v370
    %392 = vmatprep.subr.bf16.mxu0 0
    %393 = vmatpush1.bf16.msra.mxu0 %v371
    %394 = vmatprep.subr.bf16.mxu0 0
    %395 = vmatpush1.bf16.msra.mxu0 %v372
    %396 = vmatprep.subr.bf16.mxu0 0
    %397 = vmatpush1.bf16.msra.mxu0 %v373
    %398 = vmatprep.subr.bf16.mxu0 0
    %399 = vmatpush1.bf16.msra.mxu0 0
    %400 = vmatprep.subr.bf16.mxu0 0
    %401 = vmatpush1.bf16.msra.mxu0 0
    %402 = vmatprep.subr.bf16.mxu0 0
    %403 = vmatpush1.bf16.msra.mxu0 0
    %404 = vmatprep.subr.bf16.mxu0 0
    %405 = vmatpush1.bf16.msra.mxu0 0
    %406 = vmatprep.subr.bf16.mxu0 0
    %407 = vmatpush1.bf16.msra.mxu0 0
    %408 = vmatprep.subr.bf16.mxu0 0
    %409 = vmatpush1.bf16.msra.mxu0 0
    %410 = vmatprep.subr.bf16.mxu0 0
    %411 = vmatpush1.bf16.msra.mxu0 0
    %412 = vmatprep.subr.bf16.mxu0 0
    %413 = vmatpush1.bf16.msra.mxu0 0
    %414 = vmatprep.mubr.bf16.mxu0 0
    %415 = vmatmul.mubr.bf16.gmra.mrb[0].mxu0 %v318
    %v416 = vpop.f32.mrb[0].mxu0
    %v417 = vadd.f32 %v284, %v416
    %v418 = vpop.f32.mrb[0].mxu0
    %v419 = vpop.f32.mrb[0].mxu0
    %v420 = vadd.f32 %v284, %v419
    %v421 = vpop.f32.mrb[0].mxu0
    %422 = vmatprep.mubr.bf16.mxu0 0
    %423 = vmatmul.mubr.bf16.gmra.mrb[0].mxu0 %v319
    %v424 = vpop.f32.mrb[0].mxu0
    %v425 = vadd.f32 %v284, %v424
    %v426 = vpop.f32.mrb[0].mxu0
    %v427 = vpop.f32.mrb[0].mxu0
    %v428 = vadd.f32 %v284, %v427
    %v429 = vpop.f32.mrb[0].mxu0
    %430 = vmatprep.mubr.bf16.mxu0 0
    %431 = vmatmul.mubr.bf16.gmra.mrb[0].mxu0 %v320
    %v432 = vpop.f32.mrb[0].mxu0
    %v433 = vadd.f32 %v284, %v432
    %v434 = vpop.f32.mrb[0].mxu0
    %v435 = vpop.f32.mrb[0].mxu0
    %v436 = vadd.f32 %v284, %v435
    %v437 = vpop.f32.mrb[0].mxu0
    %438 = vmatprep.mubr.bf16.mxu0 0
    %439 = vmatmul.mubr.bf16.gmra.mrb[0].mxu0 %v321
    %v440 = vpop.f32.mrb[0].mxu0
    %v441 = vadd.f32 %v284, %v440
    %v442 = vpop.f32.mrb[0].mxu0
    %v443 = vpop.f32.mrb[0].mxu0
    %v444 = vadd.f32 %v284, %v443
    %v445 = vpop.f32.mrb[0].mxu0
    %446 = vmatprep.mubr.bf16.mxu0 0
    %447 = vmatmul.mubr.bf16.gmra.mrb[0].mxu0 %v322
    %v448 = vpop.f32.mrb[0].mxu0
    %v449 = vadd.f32 %v284, %v448
    %v450 = vpop.f32.mrb[0].mxu0
    %v451 = vpop.f32.mrb[0].mxu0
    %v452 = vadd.f32 %v284, %v451
    %v453 = vpop.f32.mrb[0].mxu0
    %454 = vmatprep.mubr.bf16.mxu0 0
    %455 = vmatmul.mubr.bf16.gmra.mrb[0].mxu0 %v323
    %v456 = vpop.f32.mrb[0].mxu0
    %v457 = vadd.f32 %v284, %v456
    %v458 = vpop.f32.mrb[0].mxu0
    %v459 = vpop.f32.mrb[0].mxu0
    %v460 = vadd.f32 %v284, %v459
    %v461 = vpop.f32.mrb[0].mxu0
    %462 = vmatprep.mubr.bf16.mxu0 0
    %463 = vmatmul.mubr.bf16.gmra.mrb[0].mxu0 %v324
    %v464 = vpop.f32.mrb[0].mxu0
    %v465 = vadd.f32 %v284, %v464
    %v466 = vpop.f32.mrb[0].mxu0
    %v467 = vpop.f32.mrb[0].mxu0
    %v468 = vadd.f32 %v284, %v467
    %v469 = vpop.f32.mrb[0].mxu0
    %470 = vmatprep.mubr.bf16.mxu0 0
    %471 = vmatmul.mubr.bf16.gmra.mrb[0].mxu0 %v325
    %v472 = vpop.f32.mrb[0].mxu0
    %v473 = vadd.f32 %v284, %v472
    %v474 = vpop.f32.mrb[0].mxu0
    %v475 = vpop.f32.mrb[0].mxu0
    %v476 = vadd.f32 %v284, %v475
    %v477 = vpop.f32.mrb[0].mxu0
    %478 = vdwg.mxu0
    %v479 = vmax.f32 %v417, 0.0
    %v480 = vmax.f32 %v420, 0.0
    %v481 = vmax.f32 %v425, 0.0
    %v482 = vmax.f32 %v428, 0.0
    %v483 = vmax.f32 %v433, 0.0
    %v484 = vmax.f32 %v436, 0.0
    %v485 = vmax.f32 %v441, 0.0
    %v486 = vmax.f32 %v444, 0.0
    %v487 = vmax.f32 %v449, 0.0
    %v488 = vmax.f32 %v452, 0.0
    %v489 = vmax.f32 %v457, 0.0
    %v490 = vmax.f32 %v460, 0.0
    %v491 = vmax.f32 %v465, 0.0
    %v492 = vmax.f32 %v468, 0.0
    %v493 = vmax.f32 %v473, 0.0
    %v494 = vmax.f32 %v476, 0.0
    %v495 = vpack.c.bf16 %v480, %v479
    %v496 = vpack.c.bf16 %v482, %v481
    %v497 = vpack.c.bf16 %v484, %v483
    %v498 = vpack.c.bf16 %v486, %v485
    %v499 = vpack.c.bf16 %v488, %v487
    %v500 = vpack.c.bf16 %v490, %v489
    %v501 = vpack.c.bf16 %v492, %v491
    %v502 = vpack.c.bf16 %v494, %v493
    %v519 = vunpack.c.l.b16 %v166
    %v520 = vunpack.c.l.b16 %v167
    %v521 = vunpack.c.l.b16 %v168
    %v522 = vunpack.c.l.b16 %v169
    %v523 = vunpack.c.l.b16 %v170
    %v524 = vunpack.c.l.b16 %v171
    %v525 = vunpack.c.l.b16 %v172
    %v526 = vunpack.c.l.b16 %v173
    %v527 = vunpack.c.l.b16 %v174
    %v528 = vunpack.c.l.b16 %v175
    %v529 = vunpack.c.l.b16 %v176
    %v530 = vunpack.c.l.b16 %v177
    %v531 = vunpack.c.l.b16 %v178
    %v532 = vunpack.c.l.b16 %v179
    %v533 = vunpack.c.l.b16 %v180
    %v534 = vunpack.c.l.b16 %v181
    %v535 = vpack.c.b16 %v520, %v519
    %v536 = vpack.c.b16 %v522, %v521
    %v537 = vpack.c.b16 %v524, %v523
    %v538 = vpack.c.b16 %v526, %v525
    %v539 = vpack.c.b16 %v528, %v527
    %v540 = vpack.c.b16 %v530, %v529
    %v541 = vpack.c.b16 %v532, %v531
    %v542 = vpack.c.b16 %v534, %v533
    %551 = vmatprep.subr.bf16.mxu0 0
    %552 = vmatpush1.bf16.msra.mxu0 %v495
    %553 = vmatprep.subr.bf16.mxu0 0
    %554 = vmatpush1.bf16.msra.mxu0 %v496
    %555 = vmatprep.subr.bf16.mxu0 0
    %556 = vmatpush1.bf16.msra.mxu0 %v497
    %557 = vmatprep.subr.bf16.mxu0 0
    %558 = vmatpush1.bf16.msra.mxu0 %v498
    %559 = vmatprep.subr.bf16.mxu0 0
    %560 = vmatpush1.bf16.msra.mxu0 %v499
    %561 = vmatprep.subr.bf16.mxu0 0
    %562 = vmatpush1.bf16.msra.mxu0 %v500
    %563 = vmatprep.subr.bf16.mxu0 0
    %564 = vmatpush1.bf16.msra.mxu0 %v501
    %565 = vmatprep.subr.bf16.mxu0 0
    %566 = vmatpush1.bf16.msra.mxu0 %v502
    %567 = vmatprep.subr.bf16.mxu0 0
    %568 = vmatpush1.bf16.msra.mxu0 0
    %569 = vmatprep.subr.bf16.mxu0 0
    %570 = vmatpush1.bf16.msra.mxu0 0
    %571 = vmatprep.subr.bf16.mxu0 0
    %572 = vmatpush1.bf16.msra.mxu0 0
    %573 = vmatprep.subr.bf16.mxu0 0
    %574 = vmatpush1.bf16.msra.mxu0 0
    %575 = vmatprep.subr.bf16.mxu0 0
    %576 = vmatpush1.bf16.msra.mxu0 0
    %577 = vmatprep.subr.bf16.mxu0 0
    %578 = vmatpush1.bf16.msra.mxu0 0
    %579 = vmatprep.subr.bf16.mxu0 0
    %580 = vmatpush1.bf16.msra.mxu0 0
    %581 = vmatprep.subr.bf16.mxu0 0
    %582 = vmatpush1.bf16.msra.mxu0 0
    %583 = vmatprep.mubr.bf16.mxu0 0
    %584 = vmatmul.mubr.bf16.gmra.mrb[0].mxu0 %v535
    %v585 = vpop.f32.mrb[0].mxu0
    %v586 = vadd.f32 0.0, %v585
    %v587 = vpop.f32.mrb[0].mxu0
    %v588 = vpop.f32.mrb[0].mxu0
    %v589 = vadd.f32 0.0, %v588
    %v590 = vpop.f32.mrb[0].mxu0
    %591 = vmatprep.mubr.bf16.mxu0 0
    %592 = vmatmul.mubr.bf16.gmra.mrb[0].mxu0 %v536
    %v593 = vpop.f32.mrb[0].mxu0
    %v594 = vadd.f32 0.0, %v593
    %v595 = vpop.f32.mrb[0].mxu0
    %v596 = vpop.f32.mrb[0].mxu0
    %v597 = vadd.f32 0.0, %v596
    %v598 = vpop.f32.mrb[0].mxu0
    %599 = vmatprep.mubr.bf16.mxu0 0
    %600 = vmatmul.mubr.bf16.gmra.mrb[0].mxu0 %v537
    %v601 = vpop.f32.mrb[0].mxu0
    %v602 = vadd.f32 0.0, %v601
    %v603 = vpop.f32.mrb[0].mxu0
    %v604 = vpop.f32.mrb[0].mxu0
    %v605 = vadd.f32 0.0, %v604
    %v606 = vpop.f32.mrb[0].mxu0
    %607 = vmatprep.mubr.bf16.mxu0 0
    %608 = vmatmul.mubr.bf16.gmra.mrb[0].mxu0 %v538
    %v609 = vpop.f32.mrb[0].mxu0
    %v610 = vadd.f32 0.0, %v609
    %v611 = vpop.f32.mrb[0].mxu0
    %v612 = vpop.f32.mrb[0].mxu0
    %v613 = vadd.f32 0.0, %v612
    %v614 = vpop.f32.mrb[0].mxu0
    %615 = vmatprep.mubr.bf16.mxu0 0
    %616 = vmatmul.mubr.bf16.gmra.mrb[0].mxu0 %v539
    %v617 = vpop.f32.mrb[0].mxu0
    %v618 = vadd.f32 0.0, %v617
    %v619 = vpop.f32.mrb[0].mxu0
    %v620 = vpop.f32.mrb[0].mxu0
    %v621 = vadd.f32 0.0, %v620
    %v622 = vpop.f32.mrb[0].mxu0
    %623 = vmatprep.mubr.bf16.mxu0 0
    %624 = vmatmul.mubr.bf16.gmra.mrb[0].mxu0 %v540
    %v625 = vpop.f32.mrb[0].mxu0
    %v626 = vadd.f32 0.0, %v625
    %v627 = vpop.f32.mrb[0].mxu0
    %v628 = vpop.f32.mrb[0].mxu0
    %v629 = vadd.f32 0.0, %v628
    %v630 = vpop.f32.mrb[0].mxu0
    %631 = vmatprep.mubr.bf16.mxu0 0
    %632 = vmatmul.mubr.bf16.gmra.mrb[0].mxu0 %v541
    %v633 = vpop.f32.mrb[0].mxu0
    %v634 = vadd.f32 0.0, %v633
    %v635 = vpop.f32.mrb[0].mxu0
    %v636 = vpop.f32.mrb[0].mxu0
    %v637 = vadd.f32 0.0, %v636
    %v638 = vpop.f32.mrb[0].mxu0
    %639 = vmatprep.mubr.bf16.mxu0 0
    %640 = vmatmul.mubr.bf16.gmra.mrb[0].mxu0 %v542
    %v641 = vpop.f32.mrb[0].mxu0
    %v642 = vadd.f32 0.0, %v641
    %v643 = vpop.f32.mrb[0].mxu0
    %v644 = vpop.f32.mrb[0].mxu0
    %v645 = vadd.f32 0.0, %v644
    %v646 = vpop.f32.mrb[0].mxu0
    %647 = vdwg.mxu0
    %v648 = vpack.c.bf16 %v589, %v586
    %v649 = vpack.c.bf16 %v597, %v594
    %v650 = vpack.c.bf16 %v605, %v602
    %v651 = vpack.c.bf16 %v613, %v610
    %v652 = vpack.c.bf16 %v621, %v618
    %v653 = vpack.c.bf16 %v629, %v626
    %v654 = vpack.c.bf16 %v637, %v634
    %v655 = vpack.c.bf16 %v645, %v642
    %656 = vst [vmem:[#allocation2] sm:$0xff] %v648
    %657 = vst [vmem:[#allocation2 + $0x10] sm:$0xff] %v649
    %658 = vst [vmem:[#allocation2 + $0x20] sm:$0xff] %v650
    %659 = vst [vmem:[#allocation2 + $0x30] sm:$0xff] %v651
    %660 = vst [vmem:[#allocation2 + $0x40] sm:$0xff] %v652
    %661 = vst [vmem:[#allocation2 + $0x50] sm:$0xff] %v653
    %662 = vst [vmem:[#allocation2 + $0x60] sm:$0xff] %v654
    %663 = vst [vmem:[#allocation2 + $0x70] sm:$0xff] %v655
    %664 = vst [vmem:[#allocation2 + $0x8] sm:$0xff] %v495
    %665 = vst [vmem:[#allocation2 + $0x18] sm:$0xff] %v496
    %666 = vst [vmem:[#allocation2 + $0x28] sm:$0xff] %v497
    %667 = vst [vmem:[#allocation2 + $0x38] sm:$0xff] %v498
    %668 = vst [vmem:[#allocation2 + $0x48] sm:$0xff] %v499
    %669 = vst [vmem:[#allocation2 + $0x58] sm:$0xff] %v500
    %670 = vst [vmem:[#allocation2 + $0x68] sm:$0xff] %v501
    %671 = vst [vmem:[#allocation2 + $0x78] sm:$0xff] %v502
    %v672 = vld [vmem:[#allocation2] sm:$0xff]
    %v673 = vld [vmem:[#allocation2 + $0x8] sm:$0xff]
    %v674 = vld [vmem:[#allocation2 + $0x10] sm:$0xff]
    %v675 = vld [vmem:[#allocation2 + $0x18] sm:$0xff]
    %v676 = vld [vmem:[#allocation2 + $0x20] sm:$0xff]
    %v677 = vld [vmem:[#allocation2 + $0x28] sm:$0xff]
    %v678 = vld [vmem:[#allocation2 + $0x30] sm:$0xff]
    %v679 = vld [vmem:[#allocation2 + $0x38] sm:$0xff]
    %v680 = vld [vmem:[#allocation2 + $0x40] sm:$0xff]
    %v681 = vld [vmem:[#allocation2 + $0x48] sm:$0xff]
    %v682 = vld [vmem:[#allocation2 + $0x50] sm:$0xff]
    %v683 = vld [vmem:[#allocation2 + $0x58] sm:$0xff]
    %v684 = vld [vmem:[#allocation2 + $0x60] sm:$0xff]
    %v685 = vld [vmem:[#allocation2 + $0x68] sm:$0xff]
    %v686 = vld [vmem:[#allocation2 + $0x70] sm:$0xff]
    %v687 = vld [vmem:[#allocation2 + $0x78] sm:$0xff]
    %v688 = vld [vmem:[#allocation11] sm:$0xf]
    %v689 = vld [vmem:[#allocation11 + $0x4] sm:$0xf]
    %v690 = vld [vmem:[#allocation11 + $0x8] sm:$0xf]
    %v691 = vld [vmem:[#allocation11 + $0xc] sm:$0xf]
    %v692 = vld [vmem:[#allocation11 + $0x10] sm:$0xf]
    %v693 = vld [vmem:[#allocation11 + $0x14] sm:$0xf]
    %v694 = vld [vmem:[#allocation11 + $0x18] sm:$0xf]
    %v695 = vld [vmem:[#allocation11 + $0x1c] sm:$0xf]
    %v696 = vld [vmem:[#allocation11 + $0x20] sm:$0xf]
    %v697 = vld [vmem:[#allocation11 + $0x24] sm:$0xf]
    %v698 = vld [vmem:[#allocation11 + $0x28] sm:$0xf]
    %v699 = vld [vmem:[#allocation11 + $0x2c] sm:$0xf]
    %v700 = vld [vmem:[#allocation11 + $0x30] sm:$0xf]
    %v701 = vld [vmem:[#allocation11 + $0x34] sm:$0xf]
    %v702 = vld [vmem:[#allocation11 + $0x38] sm:$0xf]
    %v703 = vld [vmem:[#allocation11 + $0x3c] sm:$0xf]
    %v704 = vld [vmem:[#allocation11 + $0x40] sm:$0xf]
    %v705 = vld [vmem:[#allocation11 + $0x44] sm:$0xf]
    %v706 = vld [vmem:[#allocation11 + $0x48] sm:$0xf]
    %v707 = vld [vmem:[#allocation11 + $0x4c] sm:$0xf]
    %v708 = vld [vmem:[#allocation11 + $0x50] sm:$0xf]
    %v709 = vld [vmem:[#allocation11 + $0x54] sm:$0xf]
    %v710 = vld [vmem:[#allocation11 + $0x58] sm:$0xf]
    %v711 = vld [vmem:[#allocation11 + $0x5c] sm:$0xf]
    %v712 = vld [vmem:[#allocation11 + $0x60] sm:$0xf]
    %v713 = vld [vmem:[#allocation11 + $0x64] sm:$0xf]
    %v714 = vld [vmem:[#allocation11 + $0x68] sm:$0xf]
    %v715 = vld [vmem:[#allocation11 + $0x6c] sm:$0xf]
    %v716 = vld [vmem:[#allocation11 + $0x70] sm:$0xf]
    %v717 = vld [vmem:[#allocation11 + $0x74] sm:$0xf]
    %v718 = vld [vmem:[#allocation11 + $0x78] sm:$0xf]
    %v719 = vld [vmem:[#allocation11 + $0x7c] sm:$0xf]
    %v720 = vld [vmem:[#allocation12] sm:$0x1]
    %v721 = vlaneseq
    %v722 = vshrl.u32 %v721, 7
    %v723 = vsub.s32 0, %v722
    %v724 = vrot.slane %v720, %v723
    %v757 = vunpack.c.l.b16 %v688
    %v758 = vunpack.c.l.b16 %v689
    %v759 = vunpack.c.l.b16 %v690
    %v760 = vunpack.c.l.b16 %v691
    %v761 = vunpack.c.l.b16 %v692
    %v762 = vunpack.c.l.b16 %v693
    %v763 = vunpack.c.l.b16 %v694
    %v764 = vunpack.c.l.b16 %v695
    %v765 = vunpack.c.l.b16 %v696
    %v766 = vunpack.c.l.b16 %v697
    %v767 = vunpack.c.l.b16 %v698
    %v768 = vunpack.c.l.b16 %v699
    %v769 = vunpack.c.l.b16 %v700
    %v770 = vunpack.c.l.b16 %v701
    %v771 = vunpack.c.l.b16 %v702
    %v772 = vunpack.c.l.b16 %v703
    %v773 = vunpack.c.l.b16 %v704
    %v774 = vunpack.c.l.b16 %v705
    %v775 = vunpack.c.l.b16 %v706
    %v776 = vunpack.c.l.b16 %v707
    %v777 = vunpack.c.l.b16 %v708
    %v778 = vunpack.c.l.b16 %v709
    %v779 = vunpack.c.l.b16 %v710
    %v780 = vunpack.c.l.b16 %v711
    %v781 = vunpack.c.l.b16 %v712
    %v782 = vunpack.c.l.b16 %v713
    %v783 = vunpack.c.l.b16 %v714
    %v784 = vunpack.c.l.b16 %v715
    %v785 = vunpack.c.l.b16 %v716
    %v786 = vunpack.c.l.b16 %v717
    %v787 = vunpack.c.l.b16 %v718
    %v788 = vunpack.c.l.b16 %v719
    %v789 = vpack.c.b16 %v758, %v757
    %v790 = vpack.c.b16 %v760, %v759
    %v791 = vpack.c.b16 %v762, %v761
    %v792 = vpack.c.b16 %v764, %v763
    %v793 = vpack.c.b16 %v766, %v765
    %v794 = vpack.c.b16 %v768, %v767
    %v795 = vpack.c.b16 %v770, %v769
    %v796 = vpack.c.b16 %v772, %v771
    %v797 = vpack.c.b16 %v774, %v773
    %v798 = vpack.c.b16 %v776, %v775
    %v799 = vpack.c.b16 %v778, %v777
    %v800 = vpack.c.b16 %v780, %v779
    %v801 = vpack.c.b16 %v782, %v781
    %v802 = vpack.c.b16 %v784, %v783
    %v803 = vpack.c.b16 %v786, %v785
    %v804 = vpack.c.b16 %v788, %v787
    %821 = vmatprep.subr.bf16.mxu0 0
    %822 = vmatpush1.bf16.msra.mxu0 %v789
    %823 = vmatprep.subr.bf16.mxu0 0
    %824 = vmatpush1.bf16.msra.mxu0 %v790
    %825 = vmatprep.subr.bf16.mxu0 0
    %826 = vmatpush1.bf16.msra.mxu0 %v791
    %827 = vmatprep.subr.bf16.mxu0 0
    %828 = vmatpush1.bf16.msra.mxu0 %v792
    %829 = vmatprep.subr.bf16.mxu0 0
    %830 = vmatpush1.bf16.msra.mxu0 %v793
    %831 = vmatprep.subr.bf16.mxu0 0
    %832 = vmatpush1.bf16.msra.mxu0 %v794
    %833 = vmatprep.subr.bf16.mxu0 0
    %834 = vmatpush1.bf16.msra.mxu0 %v795
    %835 = vmatprep.subr.bf16.mxu0 0
    %836 = vmatpush1.bf16.msra.mxu0 %v796
    %837 = vmatprep.subr.bf16.mxu0 0
    %838 = vmatpush1.bf16.msra.mxu0 %v797
    %839 = vmatprep.subr.bf16.mxu0 0
    %840 = vmatpush1.bf16.msra.mxu0 %v798
    %841 = vmatprep.subr.bf16.mxu0 0
    %842 = vmatpush1.bf16.msra.mxu0 %v799
    %843 = vmatprep.subr.bf16.mxu0 0
    %844 = vmatpush1.bf16.msra.mxu0 %v800
    %845 = vmatprep.subr.bf16.mxu0 0
    %846 = vmatpush1.bf16.msra.mxu0 %v801
    %847 = vmatprep.subr.bf16.mxu0 0
    %848 = vmatpush1.bf16.msra.mxu0 %v802
    %849 = vmatprep.subr.bf16.mxu0 0
    %850 = vmatpush1.bf16.msra.mxu0 %v803
    %851 = vmatprep.subr.bf16.mxu0 0
    %852 = vmatpush1.bf16.msra.mxu0 %v804
    %853 = vmatprep.mubr.bf16.mxu0 %v673
    %854 = vmatmul.mubr.bf16.gmra.mrb[0].mxu0 %v672
    %v855 = vpop.f32.mrb[0].mxu0
    %v856 = vadd.f32 %v724, %v855
    %v857 = vpop.f32.mrb[0].mxu0
    %v858 = vpop.f32.mrb[0].mxu0
    %v859 = vadd.f32 %v724, %v858
    %v860 = vpop.f32.mrb[0].mxu0
    %861 = vmatprep.mubr.bf16.mxu0 %v675
    %862 = vmatmul.mubr.bf16.gmra.mrb[0].mxu0 %v674
    %v863 = vpop.f32.mrb[0].mxu0
    %v864 = vadd.f32 %v724, %v863
    %v865 = vpop.f32.mrb[0].mxu0
    %v866 = vpop.f32.mrb[0].mxu0
    %v867 = vadd.f32 %v724, %v866
    %v868 = vpop.f32.mrb[0].mxu0
    %869 = vmatprep.mubr.bf16.mxu0 %v677
    %870 = vmatmul.mubr.bf16.gmra.mrb[0].mxu0 %v676
    %v871 = vpop.f32.mrb[0].mxu0
    %v872 = vadd.f32 %v724, %v871
    %v873 = vpop.f32.mrb[0].mxu0
    %v874 = vpop.f32.mrb[0].mxu0
    %v875 = vadd.f32 %v724, %v874
    %v876 = vpop.f32.mrb[0].mxu0
    %877 = vmatprep.mubr.bf16.mxu0 %v679
    %878 = vmatmul.mubr.bf16.gmra.mrb[0].mxu0 %v678
    %v879 = vpop.f32.mrb[0].mxu0
    %v880 = vadd.f32 %v724, %v879
    %v881 = vpop.f32.mrb[0].mxu0
    %v882 = vpop.f32.mrb[0].mxu0
    %v883 = vadd.f32 %v724, %v882
    %v884 = vpop.f32.mrb[0].mxu0
    %885 = vmatprep.mubr.bf16.mxu0 %v681
    %886 = vmatmul.mubr.bf16.gmra.mrb[0].mxu0 %v680
    %v887 = vpop.f32.mrb[0].mxu0
    %v888 = vadd.f32 %v724, %v887
    %v889 = vpop.f32.mrb[0].mxu0
    %v890 = vpop.f32.mrb[0].mxu0
    %v891 = vadd.f32 %v724, %v890
    %v892 = vpop.f32.mrb[0].mxu0
    %893 = vmatprep.mubr.bf16.mxu0 %v683
    %894 = vmatmul.mubr.bf16.gmra.mrb[0].mxu0 %v682
    %v895 = vpop.f32.mrb[0].mxu0
    %v896 = vadd.f32 %v724, %v895
    %v897 = vpop.f32.mrb[0].mxu0
    %v898 = vpop.f32.mrb[0].mxu0
    %v899 = vadd.f32 %v724, %v898
    %v900 = vpop.f32.mrb[0].mxu0
    %901 = vmatprep.mubr.bf16.mxu0 %v685
    %902 = vmatmul.mubr.bf16.gmra.mrb[0].mxu0 %v684
    %v903 = vpop.f32.mrb[0].mxu0
    %v904 = vadd.f32 %v724, %v903
    %v905 = vpop.f32.mrb[0].mxu0
    %v906 = vpop.f32.mrb[0].mxu0
    %v907 = vadd.f32 %v724, %v906
    %v908 = vpop.f32.mrb[0].mxu0
    %909 = vmatprep.mubr.bf16.mxu0 %v687
    %910 = vmatmul.mubr.bf16.gmra.mrb[0].mxu0 %v686
    %v911 = vpop.f32.mrb[0].mxu0
    %v912 = vadd.f32 %v724, %v911
    %v913 = vpop.f32.mrb[0].mxu0
    %v914 = vpop.f32.mrb[0].mxu0
    %v915 = vadd.f32 %v724, %v914
    %v916 = vpop.f32.mrb[0].mxu0
    %917 = vdwg.mxu0
    %v918 = vmul.f32 %v856, %v231
    %v919 = vmul.f32 %v859, %v232
    %v920 = vmul.f32 %v864, %v233
    %v921 = vmul.f32 %v867, %v234
    %v922 = vmul.f32 %v872, %v235
    %v923 = vmul.f32 %v875, %v236
    %v924 = vmul.f32 %v880, %v237
    %v925 = vmul.f32 %v883, %v238
    %v926 = vmul.f32 %v888, %v239
    %v927 = vmul.f32 %v891, %v240
    %v928 = vmul.f32 %v896, %v241
    %v929 = vmul.f32 %v899, %v242
    %v930 = vmul.f32 %v904, %v243
    %v931 = vmul.f32 %v907, %v244
    %v932 = vmul.f32 %v912, %v245
    %v933 = vmul.f32 %v915, %v246
    %v934 = vadd.f32 %v918, %v919
    %v935 = vadd.f32 %v934, %v920
    %v936 = vadd.f32 %v935, %v921
    %v937 = vadd.f32 %v936, %v922
    %v938 = vadd.f32 %v937, %v923
    %v939 = vadd.f32 %v938, %v924
    %v940 = vadd.f32 %v939, %v925
    %v941 = vadd.f32 %v940, %v926
    %v942 = vadd.f32 %v941, %v927
    %v943 = vadd.f32 %v942, %v928
    %v944 = vadd.f32 %v943, %v929
    %v945 = vadd.f32 %v944, %v930
    %v946 = vadd.f32 %v945, %v931
    %v947 = vadd.f32 %v946, %v932
    %v948 = vadd.f32 %v947, %v933
    %v949 = vrot.slane %v948, 4
    %v950 = vadd.f32 %v948, %v949
    %v951 = vrot.slane %v950, 2
    %v952 = vadd.f32 %v950, %v951
    %v953 = vrot.slane %v952, 1
    %v954 = vadd.f32 %v952, %v953
    %v955 = vrcp.pop 64.0
    %v956 = vmul.f32 %v954, %v955
    %v957 = vsub.f32 %v856, %v956
    %v958 = vsub.f32 %v859, %v956
    %v959 = vsub.f32 %v864, %v956
    %v960 = vsub.f32 %v867, %v956
    %v961 = vsub.f32 %v872, %v956
    %v962 = vsub.f32 %v875, %v956
    %v963 = vsub.f32 %v880, %v956
    %v964 = vsub.f32 %v883, %v956
    %v965 = vsub.f32 %v888, %v956
    %v966 = vsub.f32 %v891, %v956
    %v967 = vsub.f32 %v896, %v956
    %v968 = vsub.f32 %v899, %v956
    %v969 = vsub.f32 %v904, %v956
    %v970 = vsub.f32 %v907, %v956
    %v971 = vsub.f32 %v912, %v956
    %v972 = vsub.f32 %v915, %v956
    %v973 = vmul.f32 %v957, %v231
    %v974 = vmul.f32 %v958, %v232
    %v975 = vmul.f32 %v959, %v233
    %v976 = vmul.f32 %v960, %v234
    %v977 = vmul.f32 %v961, %v235
    %v978 = vmul.f32 %v962, %v236
    %v979 = vmul.f32 %v963, %v237
    %v980 = vmul.f32 %v964, %v238
    %v981 = vmul.f32 %v965, %v239
    %v982 = vmul.f32 %v966, %v240
    %v983 = vmul.f32 %v967, %v241
    %v984 = vmul.f32 %v968, %v242
    %v985 = vmul.f32 %v969, %v243
    %v986 = vmul.f32 %v970, %v244
    %v987 = vmul.f32 %v971, %v245
    %v988 = vmul.f32 %v972, %v246
    %v989 = vmul.f32 %v973, %v973
    %v990 = vmul.f32 %v974, %v974
    %v991 = vmul.f32 %v975, %v975
    %v992 = vmul.f32 %v976, %v976
    %v993 = vmul.f32 %v977, %v977
    %v994 = vmul.f32 %v978, %v978
    %v995 = vmul.f32 %v979, %v979
    %v996 = vmul.f32 %v980, %v980
    %v997 = vmul.f32 %v981, %v981
    %v998 = vmul.f32 %v982, %v982
    %v999 = vmul.f32 %v983, %v983
    %v1000 = vmul.f32 %v984, %v984
    %v1001 = vmul.f32 %v985, %v985
    %v1002 = vmul.f32 %v986, %v986
    %v1003 = vmul.f32 %v987, %v987
    %v1004 = vmul.f32 %v988, %v988
    %v1005 = vadd.f32 %v989, %v990
    %v1006 = vadd.f32 %v1005, %v991
    %v1007 = vadd.f32 %v1006, %v992
    %v1008 = vadd.f32 %v1007, %v993
    %v1009 = vadd.f32 %v1008, %v994
    %v1010 = vadd.f32 %v1009, %v995
    %v1011 = vadd.f32 %v1010, %v996
    %v1012 = vadd.f32 %v1011, %v997
    %v1013 = vadd.f32 %v1012, %v998
    %v1014 = vadd.f32 %v1013, %v999
    %v1015 = vadd.f32 %v1014, %v1000
    %v1016 = vadd.f32 %v1015, %v1001
    %v1017 = vadd.f32 %v1016, %v1002
    %v1018 = vadd.f32 %v1017, %v1003
    %v1019 = vadd.f32 %v1018, %v1004
    %v1020 = vrot.slane %v1019, 4
    %v1021 = vadd.f32 %v1019, %v1020
    %v1022 = vrot.slane %v1021, 2
    %v1023 = vadd.f32 %v1021, %v1022
    %v1024 = vrot.slane %v1023, 1
    %v1025 = vadd.f32 %v1023, %v1024
    %v1026 = vmul.f32 %v1025, %v955
    %v1027 = vld [vmem:[#allocation14] sm:$0x1]
    %v1028 = vadd.f32 %v1026, 1e-05
    %v1029 = vrsqrt.pop %v1028
    %v1030 = vmul.f32 %v1027, %v1029
    %v1031 = vld [vmem:[#allocation15] sm:$0x1]
    %v1032 = vmul.f32 %v956, %v1030
    %v1033 = vsub.f32 %v1031, %v1032
    %v1034 = vlaneseq
    %v1035 = vshrl.u32 %v1034, 7
    %v1036 = vsub.s32 0, %v1035
    %v1037 = vrot.slane %v1030, %v1036
    %v1038 = vmul.f32 %v856, %v1037
    %v1039 = vmul.f32 %v859, %v1037
    %v1040 = vmul.f32 %v864, %v1037
    %v1041 = vmul.f32 %v867, %v1037
    %v1042 = vmul.f32 %v872, %v1037
    %v1043 = vmul.f32 %v875, %v1037
    %v1044 = vmul.f32 %v880, %v1037
    %v1045 = vmul.f32 %v883, %v1037
    %v1046 = vmul.f32 %v888, %v1037
    %v1047 = vmul.f32 %v891, %v1037
    %v1048 = vmul.f32 %v896, %v1037
    %v1049 = vmul.f32 %v899, %v1037
    %v1050 = vmul.f32 %v904, %v1037
    %v1051 = vmul.f32 %v907, %v1037
    %v1052 = vmul.f32 %v912, %v1037
    %v1053 = vmul.f32 %v915, %v1037
    %v1054 = vlaneseq
    %v1055 = vshrl.u32 %v1054, 7
    %v1056 = vsub.s32 0, %v1055
    %v1057 = vrot.slane %v1033, %v1056
    %v1058 = vadd.f32 %v1038, %v1057
    %v1059 = vadd.f32 %v1039, %v1057
    %v1060 = vadd.f32 %v1040, %v1057
    %v1061 = vadd.f32 %v1041, %v1057
    %v1062 = vadd.f32 %v1042, %v1057
    %v1063 = vadd.f32 %v1043, %v1057
    %v1064 = vadd.f32 %v1044, %v1057
    %v1065 = vadd.f32 %v1045, %v1057
    %v1066 = vadd.f32 %v1046, %v1057
    %v1067 = vadd.f32 %v1047, %v1057
    %v1068 = vadd.f32 %v1048, %v1057
    %v1069 = vadd.f32 %v1049, %v1057
    %v1070 = vadd.f32 %v1050, %v1057
    %v1071 = vadd.f32 %v1051, %v1057
    %v1072 = vadd.f32 %v1052, %v1057
    %v1073 = vadd.f32 %v1053, %v1057
    %v1074 = vmax.f32 %v1058, 0.0
    %v1075 = vmax.f32 %v1059, 0.0
    %v1076 = vmax.f32 %v1060, 0.0
    %v1077 = vmax.f32 %v1061, 0.0
    %v1078 = vmax.f32 %v1062, 0.0
    %v1079 = vmax.f32 %v1063, 0.0
    %v1080 = vmax.f32 %v1064, 0.0
    %v1081 = vmax.f32 %v1065, 0.0
    %v1082 = vmax.f32 %v1066, 0.0
    %v1083 = vmax.f32 %v1067, 0.0
    %v1084 = vmax.f32 %v1068, 0.0
    %v1085 = vmax.f32 %v1069, 0.0
    %v1086 = vmax.f32 %v1070, 0.0
    %v1087 = vmax.f32 %v1071, 0.0
    %v1088 = vmax.f32 %v1072, 0.0
    %v1089 = vmax.f32 %v1073, 0.0
    %v1090 = vpack.c.bf16 %v1075, %v1074
    %v1091 = vpack.c.bf16 %v1077, %v1076
    %v1092 = vpack.c.bf16 %v1079, %v1078
    %v1093 = vpack.c.bf16 %v1081, %v1080
    %v1094 = vpack.c.bf16 %v1083, %v1082
    %v1095 = vpack.c.bf16 %v1085, %v1084
    %v1096 = vpack.c.bf16 %v1087, %v1086
    %v1097 = vpack.c.bf16 %v1089, %v1088
    %1098 = vmatprep.subr.bf16.mxu0 0
    %1099 = vmatpush1.bf16.msra.mxu0 %v1090
    %1100 = vmatprep.subr.bf16.mxu0 0
    %1101 = vmatpush1.bf16.msra.mxu0 %v1091
    %1102 = vmatprep.subr.bf16.mxu0 0
    %1103 = vmatpush1.bf16.msra.mxu0 %v1092
    %1104 = vmatprep.subr.bf16.mxu0 0
    %1105 = vmatpush1.bf16.msra.mxu0 %v1093
    %1106 = vmatprep.subr.bf16.mxu0 0
    %1107 = vmatpush1.bf16.msra.mxu0 %v1094
    %1108 = vmatprep.subr.bf16.mxu0 0
    %1109 = vmatpush1.bf16.msra.mxu0 %v1095
    %1110 = vmatprep.subr.bf16.mxu0 0
    %1111 = vmatpush1.bf16.msra.mxu0 %v1096
    %1112 = vmatprep.subr.bf16.mxu0 0
    %1113 = vmatpush1.bf16.msra.mxu0 %v1097
    %1114 = vmatprep.subr.bf16.mxu0 0
    %1115 = vmatpush1.bf16.msra.mxu0 0
    %1116 = vmatprep.subr.bf16.mxu0 0
    %1117 = vmatpush1.bf16.msra.mxu0 0
    %1118 = vmatprep.subr.bf16.mxu0 0
    %1119 = vmatpush1.bf16.msra.mxu0 0
    %1120 = vmatprep.subr.bf16.mxu0 0
    %1121 = vmatpush1.bf16.msra.mxu0 0
    %1122 = vmatprep.subr.bf16.mxu0 0
    %1123 = vmatpush1.bf16.msra.mxu0 0
    %1124 = vmatprep.subr.bf16.mxu0 0
    %1125 = vmatpush1.bf16.msra.mxu0 0
    %1126 = vmatprep.subr.bf16.mxu0 0
    %1127 = vmatpush1.bf16.msra.mxu0 0
    %1128 = vmatprep.subr.bf16.mxu0 0
    %1129 = vmatpush1.bf16.msra.mxu0 0
    %1130 = vmatprep.mubr.bf16.mxu0 0
    %1131 = vmatmul.mubr.bf16.gmra.mrb[0].mxu0 %v535
    %v1132 = vpop.f32.mrb[0].mxu0
    %v1133 = vadd.f32 0.0, %v1132
    %v1134 = vpop.f32.mrb[0].mxu0
    %v1135 = vpop.f32.mrb[0].mxu0
    %v1136 = vadd.f32 0.0, %v1135
    %v1137 = vpop.f32.mrb[0].mxu0
    %1138 = vmatprep.mubr.bf16.mxu0 0
    %1139 = vmatmul.mubr.bf16.gmra.mrb[0].mxu0 %v536
    %v1140 = vpop.f32.mrb[0].mxu0
    %v1141 = vadd.f32 0.0, %v1140
    %v1142 = vpop.f32.mrb[0].mxu0
    %v1143 = vpop.f32.mrb[0].mxu0
    %v1144 = vadd.f32 0.0, %v1143
    %v1145 = vpop.f32.mrb[0].mxu0
    %1146 = vmatprep.mubr.bf16.mxu0 0
    %1147 = vmatmul.mubr.bf16.gmra.mrb[0].mxu0 %v537
    %v1148 = vpop.f32.mrb[0].mxu0
    %v1149 = vadd.f32 0.0, %v1148
    %v1150 = vpop.f32.mrb[0].mxu0
    %v1151 = vpop.f32.mrb[0].mxu0
    %v1152 = vadd.f32 0.0, %v1151
    %v1153 = vpop.f32.mrb[0].mxu0
    %1154 = vmatprep.mubr.bf16.mxu0 0
    %1155 = vmatmul.mubr.bf16.gmra.mrb[0].mxu0 %v538
    %v1156 = vpop.f32.mrb[0].mxu0
    %v1157 = vadd.f32 0.0, %v1156
    %v1158 = vpop.f32.mrb[0].mxu0
    %v1159 = vpop.f32.mrb[0].mxu0
    %v1160 = vadd.f32 0.0, %v1159
    %v1161 = vpop.f32.mrb[0].mxu0
    %1162 = vmatprep.mubr.bf16.mxu0 0
    %1163 = vmatmul.mubr.bf16.gmra.mrb[0].mxu0 %v539
    %v1164 = vpop.f32.mrb[0].mxu0
    %v1165 = vadd.f32 0.0, %v1164
    %v1166 = vpop.f32.mrb[0].mxu0
    %v1167 = vpop.f32.mrb[0].mxu0
    %v1168 = vadd.f32 0.0, %v1167
    %v1169 = vpop.f32.mrb[0].mxu0
    %1170 = vmatprep.mubr.bf16.mxu0 0
    %1171 = vmatmul.mubr.bf16.gmra.mrb[0].mxu0 %v540
    %v1172 = vpop.f32.mrb[0].mxu0
    %v1173 = vadd.f32 0.0, %v1172
    %v1174 = vpop.f32.mrb[0].mxu0
    %v1175 = vpop.f32.mrb[0].mxu0
    %v1176 = vadd.f32 0.0, %v1175
    %v1177 = vpop.f32.mrb[0].mxu0
    %1178 = vmatprep.mubr.bf16.mxu0 0
    %1179 = vmatmul.mubr.bf16.gmra.mrb[0].mxu0 %v541
    %v1180 = vpop.f32.mrb[0].mxu0
    %v1181 = vadd.f32 0.0, %v1180
    %v1182 = vpop.f32.mrb[0].mxu0
    %v1183 = vpop.f32.mrb[0].mxu0
    %v1184 = vadd.f32 0.0, %v1183
    %v1185 = vpop.f32.mrb[0].mxu0
    %1186 = vmatprep.mubr.bf16.mxu0 0
    %1187 = vmatmul.mubr.bf16.gmra.mrb[0].mxu0 %v542
    %v1188 = vpop.f32.mrb[0].mxu0
    %v1189 = vadd.f32 0.0, %v1188
    %v1190 = vpop.f32.mrb[0].mxu0
    %v1191 = vpop.f32.mrb[0].mxu0
    %v1192 = vadd.f32 0.0, %v1191
    %v1193 = vpop.f32.mrb[0].mxu0
    %1194 = vdwg.mxu0
    %v1195 = vpack.c.bf16 %v1136, %v1133
    %v1196 = vpack.c.bf16 %v1144, %v1141
    %v1197 = vpack.c.bf16 %v1152, %v1149
    %v1198 = vpack.c.bf16 %v1160, %v1157
    %v1199 = vpack.c.bf16 %v1168, %v1165
    %v1200 = vpack.c.bf16 %v1176, %v1173
    %v1201 = vpack.c.bf16 %v1184, %v1181
    %v1202 = vpack.c.bf16 %v1192, %v1189
    %1203 = vst [vmem:[#allocation2] sm:$0xff] %v1195
    %1204 = vst [vmem:[#allocation2 + $0x10] sm:$0xff] %v1196
    %1205 = vst [vmem:[#allocation2 + $0x20] sm:$0xff] %v1197
    %1206 = vst [vmem:[#allocation2 + $0x30] sm:$0xff] %v1198
    %1207 = vst [vmem:[#allocation2 + $0x40] sm:$0xff] %v1199
    %1208 = vst [vmem:[#allocation2 + $0x50] sm:$0xff] %v1200
    %1209 = vst [vmem:[#allocation2 + $0x60] sm:$0xff] %v1201
    %1210 = vst [vmem:[#allocation2 + $0x70] sm:$0xff] %v1202
    %1211 = vst [vmem:[#allocation2 + $0x8] sm:$0xff] %v1090
    %1212 = vst [vmem:[#allocation2 + $0x18] sm:$0xff] %v1091
    %1213 = vst [vmem:[#allocation2 + $0x28] sm:$0xff] %v1092
    %1214 = vst [vmem:[#allocation2 + $0x38] sm:$0xff] %v1093
    %1215 = vst [vmem:[#allocation2 + $0x48] sm:$0xff] %v1094
    %1216 = vst [vmem:[#allocation2 + $0x58] sm:$0xff] %v1095
    %1217 = vst [vmem:[#allocation2 + $0x68] sm:$0xff] %v1096
    %1218 = vst [vmem:[#allocation2 + $0x78] sm:$0xff] %v1097
    %v1219 = vld [vmem:[#allocation2] sm:$0xff]
    %v1220 = vld [vmem:[#allocation2 + $0x8] sm:$0xff]
    %v1221 = vld [vmem:[#allocation2 + $0x10] sm:$0xff]
    %v1222 = vld [vmem:[#allocation2 + $0x18] sm:$0xff]
    %v1223 = vld [vmem:[#allocation2 + $0x20] sm:$0xff]
    %v1224 = vld [vmem:[#allocation2 + $0x28] sm:$0xff]
    %v1225 = vld [vmem:[#allocation2 + $0x30] sm:$0xff]
    %v1226 = vld [vmem:[#allocation2 + $0x38] sm:$0xff]
    %v1227 = vld [vmem:[#allocation2 + $0x40] sm:$0xff]
    %v1228 = vld [vmem:[#allocation2 + $0x48] sm:$0xff]
    %v1229 = vld [vmem:[#allocation2 + $0x50] sm:$0xff]
    %v1230 = vld [vmem:[#allocation2 + $0x58] sm:$0xff]
    %v1231 = vld [vmem:[#allocation2 + $0x60] sm:$0xff]
    %v1232 = vld [vmem:[#allocation2 + $0x68] sm:$0xff]
    %v1233 = vld [vmem:[#allocation2 + $0x70] sm:$0xff]
    %v1234 = vld [vmem:[#allocation2 + $0x78] sm:$0xff]
    %s1235 = scalar_lea.vmem [#allocation11], 128
    %v1236 = vld [vmem:[%s1235] sm:$0xf]
    %v1237 = vld [vmem:[%s1235 + $0x4] sm:$0xf]
    %v1238 = vld [vmem:[%s1235 + $0x8] sm:$0xf]
    %v1239 = vld [vmem:[%s1235 + $0xc] sm:$0xf]
    %v1240 = vld [vmem:[%s1235 + $0x10] sm:$0xf]
    %v1241 = vld [vmem:[%s1235 + $0x14] sm:$0xf]
    %v1242 = vld [vmem:[%s1235 + $0x18] sm:$0xf]
    %v1243 = vld [vmem:[%s1235 + $0x1c] sm:$0xf]
    %v1244 = vld [vmem:[%s1235 + $0x20] sm:$0xf]
    %v1245 = vld [vmem:[%s1235 + $0x24] sm:$0xf]
    %v1246 = vld [vmem:[%s1235 + $0x28] sm:$0xf]
    %v1247 = vld [vmem:[%s1235 + $0x2c] sm:$0xf]
    %v1248 = vld [vmem:[%s1235 + $0x30] sm:$0xf]
    %v1249 = vld [vmem:[%s1235 + $0x34] sm:$0xf]
    %v1250 = vld [vmem:[%s1235 + $0x38] sm:$0xf]
    %v1251 = vld [vmem:[%s1235 + $0x3c] sm:$0xf]
    %v1252 = vld [vmem:[%s1235 + $0x40] sm:$0xf]
    %v1253 = vld [vmem:[%s1235 + $0x44] sm:$0xf]
    %v1254 = vld [vmem:[%s1235 + $0x48] sm:$0xf]
    %v1255 = vld [vmem:[%s1235 + $0x4c] sm:$0xf]
    %v1256 = vld [vmem:[%s1235 + $0x50] sm:$0xf]
    %v1257 = vld [vmem:[%s1235 + $0x54] sm:$0xf]
    %v1258 = vld [vmem:[%s1235 + $0x58] sm:$0xf]
    %v1259 = vld [vmem:[%s1235 + $0x5c] sm:$0xf]
    %v1260 = vld [vmem:[%s1235 + $0x60] sm:$0xf]
    %v1261 = vld [vmem:[%s1235 + $0x64] sm:$0xf]
    %v1262 = vld [vmem:[%s1235 + $0x68] sm:$0xf]
    %v1263 = vld [vmem:[%s1235 + $0x6c] sm:$0xf]
    %v1264 = vld [vmem:[%s1235 + $0x70] sm:$0xf]
    %v1265 = vld [vmem:[%s1235 + $0x74] sm:$0xf]
    %v1266 = vld [vmem:[%s1235 + $0x78] sm:$0xf]
    %v1267 = vld [vmem:[%s1235 + $0x7c] sm:$0xf]
    %v1268 = vld [vmem:[#allocation12 + $0x1] sm:$0x1]
    %v1269 = vlaneseq
    %v1270 = vshrl.u32 %v1269, 7
    %v1271 = vsub.s32 0, %v1270
    %v1272 = vrot.slane %v1268, %v1271
    %v1305 = vunpack.c.l.b16 %v1236
    %v1306 = vunpack.c.l.b16 %v1237
    %v1307 = vunpack.c.l.b16 %v1238
    %v1308 = vunpack.c.l.b16 %v1239
    %v1309 = vunpack.c.l.b16 %v1240
    %v1310 = vunpack.c.l.b16 %v1241
    %v1311 = vunpack.c.l.b16 %v1242
    %v1312 = vunpack.c.l.b16 %v1243
    %v1313 = vunpack.c.l.b16 %v1244
    %v1314 = vunpack.c.l.b16 %v1245
    %v1315 = vunpack.c.l.b16 %v1246
    %v1316 = vunpack.c.l.b16 %v1247
    %v1317 = vunpack.c.l.b16 %v1248
    %v1318 = vunpack.c.l.b16 %v1249
    %v1319 = vunpack.c.l.b16 %v1250
    %v1320 = vunpack.c.l.b16 %v1251
    %v1321 = vunpack.c.l.b16 %v1252
    %v1322 = vunpack.c.l.b16 %v1253
    %v1323 = vunpack.c.l.b16 %v1254
    %v1324 = vunpack.c.l.b16 %v1255
    %v1325 = vunpack.c.l.b16 %v1256
    %v1326 = vunpack.c.l.b16 %v1257
    %v1327 = vunpack.c.l.b16 %v1258
    %v1328 = vunpack.c.l.b16 %v1259
    %v1329 = vunpack.c.l.b16 %v1260
    %v1330 = vunpack.c.l.b16 %v1261
    %v1331 = vunpack.c.l.b16 %v1262
    %v1332 = vunpack.c.l.b16 %v1263
    %v1333 = vunpack.c.l.b16 %v1264
    %v1334 = vunpack.c.l.b16 %v1265
    %v1335 = vunpack.c.l.b16 %v1266
    %v1336 = vunpack.c.l.b16 %v1267
    %v1337 = vpack.c.b16 %v1306, %v1305
    %v1338 = vpack.c.b16 %v1308, %v1307
    %v1339 = vpack.c.b16 %v1310, %v1309
    %v1340 = vpack.c.b16 %v1312, %v1311
    %v1341 = vpack.c.b16 %v1314, %v1313
    %v1342 = vpack.c.b16 %v1316, %v1315
    %v1343 = vpack.c.b16 %v1318, %v1317
    %v1344 = vpack.c.b16 %v1320, %v1319
    %v1345 = vpack.c.b16 %v1322, %v1321
    %v1346 = vpack.c.b16 %v1324, %v1323
    %v1347 = vpack.c.b16 %v1326, %v1325
    %v1348 = vpack.c.b16 %v1328, %v1327
    %v1349 = vpack.c.b16 %v1330, %v1329
    %v1350 = vpack.c.b16 %v1332, %v1331
    %v1351 = vpack.c.b16 %v1334, %v1333
    %v1352 = vpack.c.b16 %v1336, %v1335
    %1369 = vmatprep.subr.bf16.mxu0 0
    %1370 = vmatpush1.bf16.msra.mxu0 %v1337
    %1371 = vmatprep.subr.bf16.mxu0 0
    %1372 = vmatpush1.bf16.msra.mxu0 %v1338
    %1373 = vmatprep.subr.bf16.mxu0 0
    %1374 = vmatpush1.bf16.msra.mxu0 %v1339
    %1375 = vmatprep.subr.bf16.mxu0 0
    %1376 = vmatpush1.bf16.msra.mxu0 %v1340
    %1377 = vmatprep.subr.bf16.mxu0 0
    %1378 = vmatpush1.bf16.msra.mxu0 %v1341
    %1379 = vmatprep.subr.bf16.mxu0 0
    %1380 = vmatpush1.bf16.msra.mxu0 %v1342
    %1381 = vmatprep.subr.bf16.mxu0 0
    %1382 = vmatpush1.bf16.msra.mxu0 %v1343
    %1383 = vmatprep.subr.bf16.mxu0 0
    %1384 = vmatpush1.bf16.msra.mxu0 %v1344
    %1385 = vmatprep.subr.bf16.mxu0 0
    %1386 = vmatpush1.bf16.msra.mxu0 %v1345
    %1387 = vmatprep.subr.bf16.mxu0 0
    %1388 = vmatpush1.bf16.msra.mxu0 %v1346
    %1389 = vmatprep.subr.bf16.mxu0 0
    %1390 = vmatpush1.bf16.msra.mxu0 %v1347
    %1391 = vmatprep.subr.bf16.mxu0 0
    %1392 = vmatpush1.bf16.msra.mxu0 %v1348
    %1393 = vmatprep.subr.bf16.mxu0 0
    %1394 = vmatpush1.bf16.msra.mxu0 %v1349
    %1395 = vmatprep.subr.bf16.mxu0 0
    %1396 = vmatpush1.bf16.msra.mxu0 %v1350
    %1397 = vmatprep.subr.bf16.mxu0 0
    %1398 = vmatpush1.bf16.msra.mxu0 %v1351
    %1399 = vmatprep.subr.bf16.mxu0 0
    %1400 = vmatpush1.bf16.msra.mxu0 %v1352
    %1401 = vmatprep.mubr.bf16.mxu0 %v1220
    %1402 = vmatmul.mubr.bf16.gmra.mrb[0].mxu0 %v1219
    %v1403 = vpop.f32.mrb[0].mxu0
    %v1404 = vadd.f32 %v1272, %v1403
    %v1405 = vpop.f32.mrb[0].mxu0
    %v1406 = vpop.f32.mrb[0].mxu0
    %v1407 = vadd.f32 %v1272, %v1406
    %v1408 = vpop.f32.mrb[0].mxu0
    %1409 = vmatprep.mubr.bf16.mxu0 %v1222
    %1410 = vmatmul.mubr.bf16.gmra.mrb[0].mxu0 %v1221
    %v1411 = vpop.f32.mrb[0].mxu0
    %v1412 = vadd.f32 %v1272, %v1411
    %v1413 = vpop.f32.mrb[0].mxu0
    %v1414 = vpop.f32.mrb[0].mxu0
    %v1415 = vadd.f32 %v1272, %v1414
    %v1416 = vpop.f32.mrb[0].mxu0
    %1417 = vmatprep.mubr.bf16.mxu0 %v1224
    %1418 = vmatmul.mubr.bf16.gmra.mrb[0].mxu0 %v1223
    %v1419 = vpop.f32.mrb[0].mxu0
    %v1420 = vadd.f32 %v1272, %v1419
    %v1421 = vpop.f32.mrb[0].mxu0
    %v1422 = vpop.f32.mrb[0].mxu0
    %v1423 = vadd.f32 %v1272, %v1422
    %v1424 = vpop.f32.mrb[0].mxu0
    %1425 = vmatprep.mubr.bf16.mxu0 %v1226
    %1426 = vmatmul.mubr.bf16.gmra.mrb[0].mxu0 %v1225
    %v1427 = vpop.f32.mrb[0].mxu0
    %v1428 = vadd.f32 %v1272, %v1427
    %v1429 = vpop.f32.mrb[0].mxu0
    %v1430 = vpop.f32.mrb[0].mxu0
    %v1431 = vadd.f32 %v1272, %v1430
    %v1432 = vpop.f32.mrb[0].mxu0
    %1433 = vmatprep.mubr.bf16.mxu0 %v1228
    %1434 = vmatmul.mubr.bf16.gmra.mrb[0].mxu0 %v1227
    %v1435 = vpop.f32.mrb[0].mxu0
    %v1436 = vadd.f32 %v1272, %v1435
    %v1437 = vpop.f32.mrb[0].mxu0
    %v1438 = vpop.f32.mrb[0].mxu0
    %v1439 = vadd.f32 %v1272, %v1438
    %v1440 = vpop.f32.mrb[0].mxu0
    %1441 = vmatprep.mubr.bf16.mxu0 %v1230
    %1442 = vmatmul.mubr.bf16.gmra.mrb[0].mxu0 %v1229
    %v1443 = vpop.f32.mrb[0].mxu0
    %v1444 = vadd.f32 %v1272, %v1443
    %v1445 = vpop.f32.mrb[0].mxu0
    %v1446 = vpop.f32.mrb[0].mxu0
    %v1447 = vadd.f32 %v1272, %v1446
    %v1448 = vpop.f32.mrb[0].mxu0
    %1449 = vmatprep.mubr.bf16.mxu0 %v1232
    %1450 = vmatmul.mubr.bf16.gmra.mrb[0].mxu0 %v1231
    %v1451 = vpop.f32.mrb[0].mxu0
    %v1452 = vadd.f32 %v1272, %v1451
    %v1453 = vpop.f32.mrb[0].mxu0
    %v1454 = vpop.f32.mrb[0].mxu0
    %v1455 = vadd.f32 %v1272, %v1454
    %v1456 = vpop.f32.mrb[0].mxu0
    %1457 = vmatprep.mubr.bf16.mxu0 %v1234
    %1458 = vmatmul.mubr.bf16.gmra.mrb[0].mxu0 %v1233
    %v1459 = vpop.f32.mrb[0].mxu0
    %v1460 = vadd.f32 %v1272, %v1459
    %v1461 = vpop.f32.mrb[0].mxu0
    %v1462 = vpop.f32.mrb[0].mxu0
    %v1463 = vadd.f32 %v1272, %v1462
    %v1464 = vpop.f32.mrb[0].mxu0
    %1465 = vdwg.mxu0
    %1466 = vst [vmem:[#allocation20] sm:$0xff] %v1404
    %1467 = vst [vmem:[#allocation20 + $0x8] sm:$0xff] %v1407
    %1468 = vst [vmem:[#allocation20 + $0x10] sm:$0xff] %v1412
    %1469 = vst [vmem:[#allocation20 + $0x18] sm:$0xff] %v1415
    %1470 = vst [vmem:[#allocation20 + $0x20] sm:$0xff] %v1420
    %1471 = vst [vmem:[#allocation20 + $0x28] sm:$0xff] %v1423
    %1472 = vst [vmem:[#allocation20 + $0x30] sm:$0xff] %v1428
    %1473 = vst [vmem:[#allocation20 + $0x38] sm:$0xff] %v1431
    %1474 = vst [vmem:[#allocation20 + $0x40] sm:$0xff] %v1436
    %1475 = vst [vmem:[#allocation20 + $0x48] sm:$0xff] %v1439
    %1476 = vst [vmem:[#allocation20 + $0x50] sm:$0xff] %v1444
    %1477 = vst [vmem:[#allocation20 + $0x58] sm:$0xff] %v1447
    %1478 = vst [vmem:[#allocation20 + $0x60] sm:$0xff] %v1452
    %1479 = vst [vmem:[#allocation20 + $0x68] sm:$0xff] %v1455
    %1480 = vst [vmem:[#allocation20 + $0x70] sm:$0xff] %v1460
    %1481 = vst [vmem:[#allocation20 + $0x78] sm:$0xff] %v1463
    %v1482 = vmul.f32 %v1404, %v231
    %v1483 = vmul.f32 %v1407, %v232
    %v1484 = vmul.f32 %v1412, %v233
    %v1485 = vmul.f32 %v1415, %v234
    %v1486 = vmul.f32 %v1420, %v235
    %v1487 = vmul.f32 %v1423, %v236
    %v1488 = vmul.f32 %v1428, %v237
    %v1489 = vmul.f32 %v1431, %v238
    %v1490 = vmul.f32 %v1436, %v239
    %v1491 = vmul.f32 %v1439, %v240
    %v1492 = vmul.f32 %v1444, %v241
    %v1493 = vmul.f32 %v1447, %v242
    %v1494 = vmul.f32 %v1452, %v243
    %v1495 = vmul.f32 %v1455, %v244
    %v1496 = vmul.f32 %v1460, %v245
    %v1497 = vmul.f32 %v1463, %v246
    %v1498 = vadd.f32 %v1482, %v1483
    %v1499 = vadd.f32 %v1498, %v1484
    %v1500 = vadd.f32 %v1499, %v1485
    %v1501 = vadd.f32 %v1500, %v1486
    %v1502 = vadd.f32 %v1501, %v1487
    %v1503 = vadd.f32 %v1502, %v1488
    %v1504 = vadd.f32 %v1503, %v1489
    %v1505 = vadd.f32 %v1504, %v1490
    %v1506 = vadd.f32 %v1505, %v1491
    %v1507 = vadd.f32 %v1506, %v1492
    %v1508 = vadd.f32 %v1507, %v1493
    %v1509 = vadd.f32 %v1508, %v1494
    %v1510 = vadd.f32 %v1509, %v1495
    %v1511 = vadd.f32 %v1510, %v1496
    %v1512 = vadd.f32 %v1511, %v1497
    %v1513 = vrot.slane %v1512, 4
    %v1514 = vadd.f32 %v1512, %v1513
    %v1515 = vrot.slane %v1514, 2
    %v1516 = vadd.f32 %v1514, %v1515
    %v1517 = vrot.slane %v1516, 1
    %v1518 = vadd.f32 %v1516, %v1517
    %v1519 = vmul.f32 %v1518, %v955
    %v1520 = vsub.f32 %v1404, %v1519
    %v1521 = vsub.f32 %v1407, %v1519
    %v1522 = vsub.f32 %v1412, %v1519
    %v1523 = vsub.f32 %v1415, %v1519
    %v1524 = vsub.f32 %v1420, %v1519
    %v1525 = vsub.f32 %v1423, %v1519
    %v1526 = vsub.f32 %v1428, %v1519
    %v1527 = vsub.f32 %v1431, %v1519
    %v1528 = vsub.f32 %v1436, %v1519
    %v1529 = vsub.f32 %v1439, %v1519
    %v1530 = vsub.f32 %v1444, %v1519
    %v1531 = vsub.f32 %v1447, %v1519
    %v1532 = vsub.f32 %v1452, %v1519
    %v1533 = vsub.f32 %v1455, %v1519
    %v1534 = vsub.f32 %v1460, %v1519
    %v1535 = vsub.f32 %v1463, %v1519
    %v1536 = vmul.f32 %v1520, %v231
    %v1537 = vmul.f32 %v1521, %v232
    %v1538 = vmul.f32 %v1522, %v233
    %v1539 = vmul.f32 %v1523, %v234
    %v1540 = vmul.f32 %v1524, %v235
    %v1541 = vmul.f32 %v1525, %v236
    %v1542 = vmul.f32 %v1526, %v237
    %v1543 = vmul.f32 %v1527, %v238
    %v1544 = vmul.f32 %v1528, %v239
    %v1545 = vmul.f32 %v1529, %v240
    %v1546 = vmul.f32 %v1530, %v241
    %v1547 = vmul.f32 %v1531, %v242
    %v1548 = vmul.f32 %v1532, %v243
    %v1549 = vmul.f32 %v1533, %v244
    %v1550 = vmul.f32 %v1534, %v245
    %v1551 = vmul.f32 %v1535, %v246
    %v1552 = vmul.f32 %v1536, %v1536
    %v1553 = vmul.f32 %v1537, %v1537
    %v1554 = vmul.f32 %v1538, %v1538
    %v1555 = vmul.f32 %v1539, %v1539
    %v1556 = vmul.f32 %v1540, %v1540
    %v1557 = vmul.f32 %v1541, %v1541
    %v1558 = vmul.f32 %v1542, %v1542
    %v1559 = vmul.f32 %v1543, %v1543
    %v1560 = vmul.f32 %v1544, %v1544
    %v1561 = vmul.f32 %v1545, %v1545
    %v1562 = vmul.f32 %v1546, %v1546
    %v1563 = vmul.f32 %v1547, %v1547
    %v1564 = vmul.f32 %v1548, %v1548
    %v1565 = vmul.f32 %v1549, %v1549
    %v1566 = vmul.f32 %v1550, %v1550
    %v1567 = vmul.f32 %v1551, %v1551
    %v1568 = vadd.f32 %v1552, %v1553
    %v1569 = vadd.f32 %v1568, %v1554
    %v1570 = vadd.f32 %v1569, %v1555
    %v1571 = vadd.f32 %v1570, %v1556
    %v1572 = vadd.f32 %v1571, %v1557
    %v1573 = vadd.f32 %v1572, %v1558
    %v1574 = vadd.f32 %v1573, %v1559
    %v1575 = vadd.f32 %v1574, %v1560
    %v1576 = vadd.f32 %v1575, %v1561
    %v1577 = vadd.f32 %v1576, %v1562
    %v1578 = vadd.f32 %v1577, %v1563
    %v1579 = vadd.f32 %v1578, %v1564
    %v1580 = vadd.f32 %v1579, %v1565
    %v1581 = vadd.f32 %v1580, %v1566
    %v1582 = vadd.f32 %v1581, %v1567
    %v1583 = vrot.slane %v1582, 4
    %v1584 = vadd.f32 %v1582, %v1583
    %v1585 = vrot.slane %v1584, 2
    %v1586 = vadd.f32 %v1584, %v1585
    %v1587 = vrot.slane %v1586, 1
    %v1588 = vadd.f32 %v1586, %v1587
    %v1589 = vmul.f32 %v1588, %v955
    %v1590 = vld [vmem:[#allocation14 + $0x1] sm:$0x1]
    %v1591 = vadd.f32 %v1589, 1e-05
    %v1592 = vrsqrt.pop %v1591
    %v1593 = vmul.f32 %v1590, %v1592
    %v1594 = vld [vmem:[#allocation15 + $0x1] sm:$0x1]
    %v1595 = vmul.f32 %v1519, %v1593
    %v1596 = vsub.f32 %v1594, %v1595
    %v1597 = vlaneseq
    %v1598 = vshrl.u32 %v1597, 7
    %v1599 = vsub.s32 0, %v1598
    %v1600 = vrot.slane %v1593, %v1599
    %v1601 = vmul.f32 %v1404, %v1600
    %v1602 = vmul.f32 %v1407, %v1600
    %v1603 = vmul.f32 %v1412, %v1600
    %v1604 = vmul.f32 %v1415, %v1600
    %v1605 = vmul.f32 %v1420, %v1600
    %v1606 = vmul.f32 %v1423, %v1600
    %v1607 = vmul.f32 %v1428, %v1600
    %v1608 = vmul.f32 %v1431, %v1600
    %v1609 = vmul.f32 %v1436, %v1600
    %v1610 = vmul.f32 %v1439, %v1600
    %v1611 = vmul.f32 %v1444, %v1600
    %v1612 = vmul.f32 %v1447, %v1600
    %v1613 = vmul.f32 %v1452, %v1600
    %v1614 = vmul.f32 %v1455, %v1600
    %v1615 = vmul.f32 %v1460, %v1600
    %v1616 = vmul.f32 %v1463, %v1600
    %v1617 = vlaneseq
    %v1618 = vshrl.u32 %v1617, 7
    %v1619 = vsub.s32 0, %v1618
    %v1620 = vrot.slane %v1596, %v1619
    %v1621 = vadd.f32 %v1601, %v1620
    %v1622 = vadd.f32 %v1602, %v1620
    %v1623 = vadd.f32 %v1603, %v1620
    %v1624 = vadd.f32 %v1604, %v1620
    %v1625 = vadd.f32 %v1605, %v1620
    %v1626 = vadd.f32 %v1606, %v1620
    %v1627 = vadd.f32 %v1607, %v1620
    %v1628 = vadd.f32 %v1608, %v1620
    %v1629 = vadd.f32 %v1609, %v1620
    %v1630 = vadd.f32 %v1610, %v1620
    %v1631 = vadd.f32 %v1611, %v1620
    %v1632 = vadd.f32 %v1612, %v1620
    %v1633 = vadd.f32 %v1613, %v1620
    %v1634 = vadd.f32 %v1614, %v1620
    %v1635 = vadd.f32 %v1615, %v1620
    %v1636 = vadd.f32 %v1616, %v1620
    %v1637 = vmax.f32 %v1621, 0.0
    %v1638 = vmax.f32 %v1622, 0.0
    %v1639 = vmax.f32 %v1623, 0.0
    %v1640 = vmax.f32 %v1624, 0.0
    %v1641 = vmax.f32 %v1625, 0.0
    %v1642 = vmax.f32 %v1626, 0.0
    %v1643 = vmax.f32 %v1627, 0.0
    %v1644 = vmax.f32 %v1628, 0.0
    %v1645 = vmax.f32 %v1629, 0.0
    %v1646 = vmax.f32 %v1630, 0.0
    %v1647 = vmax.f32 %v1631, 0.0
    %v1648 = vmax.f32 %v1632, 0.0
    %v1649 = vmax.f32 %v1633, 0.0
    %v1650 = vmax.f32 %v1634, 0.0
    %v1651 = vmax.f32 %v1635, 0.0
    %v1652 = vmax.f32 %v1636, 0.0
    %v1653 = vpack.c.bf16 %v1638, %v1637
    %v1654 = vpack.c.bf16 %v1640, %v1639
    %v1655 = vpack.c.bf16 %v1642, %v1641
    %v1656 = vpack.c.bf16 %v1644, %v1643
    %v1657 = vpack.c.bf16 %v1646, %v1645
    %v1658 = vpack.c.bf16 %v1648, %v1647
    %v1659 = vpack.c.bf16 %v1650, %v1649
    %v1660 = vpack.c.bf16 %v1652, %v1651
    %v1661 = vld [vmem:[#allocation17] sm:$0xf]
    %v1662 = vld [vmem:[#allocation17 + $0x4] sm:$0xf]
    %v1663 = vld [vmem:[#allocation17 + $0x8] sm:$0xf]
    %v1664 = vld [vmem:[#allocation17 + $0xc] sm:$0xf]
    %v1665 = vld [vmem:[#allocation17 + $0x10] sm:$0xf]
    %v1666 = vld [vmem:[#allocation17 + $0x14] sm:$0xf]
    %v1667 = vld [vmem:[#allocation17 + $0x18] sm:$0xf]
    %v1668 = vld [vmem:[#allocation17 + $0x1c] sm:$0xf]
    %v1669 = vld [vmem:[#allocation17 + $0x20] sm:$0xf]
    %v1670 = vld [vmem:[#allocation17 + $0x24] sm:$0xf]
    %v1671 = vld [vmem:[#allocation17 + $0x28] sm:$0xf]
    %v1672 = vld [vmem:[#allocation17 + $0x2c] sm:$0xf]
    %v1673 = vld [vmem:[#allocation17 + $0x30] sm:$0xf]
    %v1674 = vld [vmem:[#allocation17 + $0x34] sm:$0xf]
    %v1675 = vld [vmem:[#allocation17 + $0x38] sm:$0xf]
    %v1676 = vld [vmem:[#allocation17 + $0x3c] sm:$0xf]
    %v1677 = vld [vmem:[#allocation18] sm:$0x1]
    %v1679 = vlaneseq
    %v1680 = vshrl.u32 %v1679, 7
    %v1681 = vsub.s32 0, %v1680
    %v1682 = vrot.slane %v1677, %v1681
    %v1700 = vunpack.c.l.b16 %v1661
    %v1701 = vunpack.c.l.b16 %v1662
    %v1702 = vunpack.c.l.b16 %v1663
    %v1703 = vunpack.c.l.b16 %v1664
    %v1704 = vunpack.c.l.b16 %v1665
    %v1705 = vunpack.c.l.b16 %v1666
    %v1706 = vunpack.c.l.b16 %v1667
    %v1707 = vunpack.c.l.b16 %v1668
    %v1708 = vunpack.c.l.b16 %v1669
    %v1709 = vunpack.c.l.b16 %v1670
    %v1710 = vunpack.c.l.b16 %v1671
    %v1711 = vunpack.c.l.b16 %v1672
    %v1712 = vunpack.c.l.b16 %v1673
    %v1713 = vunpack.c.l.b16 %v1674
    %v1714 = vunpack.c.l.b16 %v1675
    %v1715 = vunpack.c.l.b16 %v1676
    %v1716 = vpack.c.b16 %v1701, %v1700
    %v1717 = vpack.c.b16 %v1703, %v1702
    %v1718 = vpack.c.b16 %v1705, %v1704
    %v1719 = vpack.c.b16 %v1707, %v1706
    %v1720 = vpack.c.b16 %v1709, %v1708
    %v1721 = vpack.c.b16 %v1711, %v1710
    %v1722 = vpack.c.b16 %v1713, %v1712
    %v1723 = vpack.c.b16 %v1715, %v1714
    %1732 = vmatprep.subr.bf16.mxu0 0
    %1733 = vmatpush1.bf16.msra.mxu0 %v1716
    %1734 = vmatprep.subr.bf16.mxu0 0
    %1735 = vmatpush1.bf16.msra.mxu0 %v1717
    %1736 = vmatprep.subr.bf16.mxu0 0
    %1737 = vmatpush1.bf16.msra.mxu0 %v1718
    %1738 = vmatprep.subr.bf16.mxu0 0
    %1739 = vmatpush1.bf16.msra.mxu0 %v1719
    %1740 = vmatprep.subr.bf16.mxu0 0
    %1741 = vmatpush1.bf16.msra.mxu0 %v1720
    %1742 = vmatprep.subr.bf16.mxu0 0
    %1743 = vmatpush1.bf16.msra.mxu0 %v1721
    %1744 = vmatprep.subr.bf16.mxu0 0
    %1745 = vmatpush1.bf16.msra.mxu0 %v1722
    %1746 = vmatprep.subr.bf16.mxu0 0
    %1747 = vmatpush1.bf16.msra.mxu0 %v1723
    %1748 = vmatprep.subr.bf16.mxu0 0
    %1749 = vmatpush1.bf16.msra.mxu0 0
    %1750 = vmatprep.subr.bf16.mxu0 0
    %1751 = vmatpush1.bf16.msra.mxu0 0
    %1752 = vmatprep.subr.bf16.mxu0 0
    %1753 = vmatpush1.bf16.msra.mxu0 0
    %1754 = vmatprep.subr.bf16.mxu0 0
    %1755 = vmatpush1.bf16.msra.mxu0 0
    %1756 = vmatprep.subr.bf16.mxu0 0
    %1757 = vmatpush1.bf16.msra.mxu0 0
    %1758 = vmatprep.subr.bf16.mxu0 0
    %1759 = vmatpush1.bf16.msra.mxu0 0
    %1760 = vmatprep.subr.bf16.mxu0 0
    %1761 = vmatpush1.bf16.msra.mxu0 0
    %1762 = vmatprep.subr.bf16.mxu0 0
    %1763 = vmatpush1.bf16.msra.mxu0 0
    %1764 = vmatprep.mubr.bf16.mxu0 0
    %1765 = vmatmul.mubr.bf16.gmra.mrb[0].mxu0 %v1653
    %v1766 = vpop.f32.mrb[0].mxu0
    %v1767 = vadd.f32 %v1682, %v1766
    %v1768 = vpop.f32.mrb[0].mxu0
    %v1769 = vpop.f32.mrb[0].mxu0
    %v1770 = vadd.f32 %v1682, %v1769
    %v1771 = vpop.f32.mrb[0].mxu0
    %1772 = vmatprep.mubr.bf16.mxu0 0
    %1773 = vmatmul.mubr.bf16.gmra.mrb[0].mxu0 %v1654
    %v1774 = vpop.f32.mrb[0].mxu0
    %v1775 = vadd.f32 %v1682, %v1774
    %v1776 = vpop.f32.mrb[0].mxu0
    %v1777 = vpop.f32.mrb[0].mxu0
    %v1778 = vadd.f32 %v1682, %v1777
    %v1779 = vpop.f32.mrb[0].mxu0
    %1780 = vmatprep.mubr.bf16.mxu0 0
    %1781 = vmatmul.mubr.bf16.gmra.mrb[0].mxu0 %v1655
    %v1782 = vpop.f32.mrb[0].mxu0
    %v1783 = vadd.f32 %v1682, %v1782
    %v1784 = vpop.f32.mrb[0].mxu0
    %v1785 = vpop.f32.mrb[0].mxu0
    %v1786 = vadd.f32 %v1682, %v1785
    %v1787 = vpop.f32.mrb[0].mxu0
    %1788 = vmatprep.mubr.bf16.mxu0 0
    %1789 = vmatmul.mubr.bf16.gmra.mrb[0].mxu0 %v1656
    %v1790 = vpop.f32.mrb[0].mxu0
    %v1791 = vadd.f32 %v1682, %v1790
    %v1792 = vpop.f32.mrb[0].mxu0
    %v1793 = vpop.f32.mrb[0].mxu0
    %v1794 = vadd.f32 %v1682, %v1793
    %v1795 = vpop.f32.mrb[0].mxu0
    %1796 = vmatprep.mubr.bf16.mxu0 0
    %1797 = vmatmul.mubr.bf16.gmra.mrb[0].mxu0 %v1657
    %v1798 = vpop.f32.mrb[0].mxu0
    %v1799 = vadd.f32 %v1682, %v1798
    %v1800 = vpop.f32.mrb[0].mxu0
    %v1801 = vpop.f32.mrb[0].mxu0
    %v1802 = vadd.f32 %v1682, %v1801
    %v1803 = vpop.f32.mrb[0].mxu0
    %1804 = vmatprep.mubr.bf16.mxu0 0
    %1805 = vmatmul.mubr.bf16.gmra.mrb[0].mxu0 %v1658
    %v1806 = vpop.f32.mrb[0].mxu0
    %v1807 = vadd.f32 %v1682, %v1806
    %v1808 = vpop.f32.mrb[0].mxu0
    %v1809 = vpop.f32.mrb[0].mxu0
    %v1810 = vadd.f32 %v1682, %v1809
    %v1811 = vpop.f32.mrb[0].mxu0
    %1812 = vmatprep.mubr.bf16.mxu0 0
    %1813 = vmatmul.mubr.bf16.gmra.mrb[0].mxu0 %v1659
    %v1814 = vpop.f32.mrb[0].mxu0
    %v1815 = vadd.f32 %v1682, %v1814
    %v1816 = vpop.f32.mrb[0].mxu0
    %v1817 = vpop.f32.mrb[0].mxu0
    %v1818 = vadd.f32 %v1682, %v1817
    %v1819 = vpop.f32.mrb[0].mxu0
    %1820 = vmatprep.mubr.bf16.mxu0 0
    %1821 = vmatmul.mubr.bf16.gmra.mrb[0].mxu0 %v1660
    %v1822 = vpop.f32.mrb[0].mxu0
    %v1823 = vadd.f32 %v1682, %v1822
    %v1824 = vpop.f32.mrb[0].mxu0
    %v1825 = vpop.f32.mrb[0].mxu0
    %v1826 = vadd.f32 %v1682, %v1825
    %v1827 = vpop.f32.mrb[0].mxu0
    %1828 = vdwg.mxu0
    %1829 = vst [vmem:[#allocation21] sm:$0xff] %v1767
    %1830 = vst [vmem:[#allocation21 + $0x8] sm:$0xff] %v1770
    %1831 = vst [vmem:[#allocation21 + $0x10] sm:$0xff] %v1775
    %1832 = vst [vmem:[#allocation21 + $0x18] sm:$0xff] %v1778
    %1833 = vst [vmem:[#allocation21 + $0x20] sm:$0xff] %v1783
    %1834 = vst [vmem:[#allocation21 + $0x28] sm:$0xff] %v1786
    %1835 = vst [vmem:[#allocation21 + $0x30] sm:$0xff] %v1791
    %1836 = vst [vmem:[#allocation21 + $0x38] sm:$0xff] %v1794
    %1837 = vst [vmem:[#allocation21 + $0x40] sm:$0xff] %v1799
    %1838 = vst [vmem:[#allocation21 + $0x48] sm:$0xff] %v1802
    %1839 = vst [vmem:[#allocation21 + $0x50] sm:$0xff] %v1807
    %1840 = vst [vmem:[#allocation21 + $0x58] sm:$0xff] %v1810
    %1841 = vst [vmem:[#allocation21 + $0x60] sm:$0xff] %v1815
    %1842 = vst [vmem:[#allocation21 + $0x68] sm:$0xff] %v1818
    %1843 = vst [vmem:[#allocation21 + $0x70] sm:$0xff] %v1823
    %1844 = vst [vmem:[#allocation21 + $0x78] sm:$0xff] %v1826
    // Predicated region
    $region82: #{tpu_custom_call.1} parent=1 // pred_check
      _
    $region83: #{tpu_custom_call.1} parent=1 // pred_check_branch
      %1846 = sbr.rel (0) target = $region85
    $region84: #{tpu_custom_call.1} parent=1 // pred_region
      %s1848 = ssub.s32 2048, 2048
      %1849 = vsyncadd [#allocation5], %s1848
      %s1850 = sshll.u32 [#allocation20], 4
      %s1851 = int_to_ptr.vmem [resolvable:$true] %s1850
      %1856 = dma.vmem_to_hbm [thread:$0]  %s1851, 2048, %s10, [#allocation5], 128, 128, 8
    $region85: #{tpu_custom_call.1} parent=1 // pred_fallthru
      _
    // Predicated region
    $region86: #{tpu_custom_call.1} parent=1 // pred_check
      _
    $region87: #{tpu_custom_call.1} parent=1 // pred_check_branch
      %1858 = sbr.rel (0) target = $region89
    $region88: #{tpu_custom_call.1} parent=1 // pred_region
      %s1860 = ssub.s32 2048, 2048
      %1861 = vsyncadd [#allocation22], %s1860
      %s1862 = sshll.u32 [#allocation21], 4
      %s1863 = int_to_ptr.vmem [resolvable:$true] %s1862
      %1868 = dma.vmem_to_hbm [thread:$0]  %s1863, 2048, %s11, [#allocation22], 128, 128, 8
    $region89: #{tpu_custom_call.1} parent=1 // pred_fallthru
      _
    // Predicated region
    $region90: #{tpu_custom_call.1} parent=1 // pred_check
      _
    $region91: #{tpu_custom_call.1} parent=1 // pred_check_branch
      %1870 = sbr.rel (0) target = $region93
    $region92: #{tpu_custom_call.1} parent=1 // pred_region
      %1871 = dma.done [#allocation5], 2048
    $region93: #{tpu_custom_call.1} parent=1 // pred_fallthru
      _
    // Predicated region
    $region94: #{tpu_custom_call.1} parent=1 // pred_check
      _
    $region95: #{tpu_custom_call.1} parent=1 // pred_check_branch
      %1873 = sbr.rel (0) target = $region97
    $region96: #{tpu_custom_call.1} parent=1 // pred_region
      %1874 = dma.done [#allocation22], 2048
    $region97: #{tpu_custom_call.1} parent=1 // pred_fallthru
      _
    %1875 = vsyncpa [#allocation4], 1
    %1876 = vsyncpa [#allocation7], 1
    %1877 = vsyncpa [#allocation10], 1
    %1878 = vsyncpa [#allocation13], 1
    %1879 = vsyncpa [#allocation16], 1
    %1880 = vsyncpa [#allocation19], 1
    %1881 = vsyncpa [#allocation5], 1
    %1882 = vsyncpa [#allocation22], 1

</llo_original>
